<compile_context>
chip_gen: v5e
topology: v5e:2x2
jax: 0.10.0
libtpu: 0.0.40
codegen_flags: <defaults>
</compile_context>

<pallas_src>
import jax
import jax.numpy as jnp
from jax import lax
from jax.experimental import pallas as pl
from jax.experimental.pallas import tpu as pltpu

VOCAB = 64          # input_size (vocabulary), small demo size
HIDDEN = 128        # hidden_size (lane-aligned demo size)


def _encoder_gru_seq_kernel(tok_ref,      # SMEM (T,)        int32  token ids (scalar prefetch)
                            emb_ref,      # VMEM (VOCAB, H)  f32    embedding table (resident)
                            h0_ref,       # VMEM (1, H)      f32    initial hidden
                            w_ih_ref,     # VMEM (H, 3H)     bf16   input weights, gates r|z|n on lanes
                            w_hh_ref,     # VMEM (H, 3H)     bf16   hidden weights, gates r|z|n on lanes
                            b_all_ref,    # VMEM (1, 3H)     f32    [b_ih_r+b_hh_r | b_ih_z+b_hh_z | b_ih_n]
                            b_hn_ref,     # VMEM (1, H)      f32    b_hh (n gate), multiplied by r
                            out_ref,      # VMEM (T, H)      f32    per-step hidden states (dense)
                            x_scr,        # VMEM (T, H)      f32    gathered embeddings
                            gi_scr):      # VMEM (T, 3H)     f32    precomputed input-to-hidden gates
    T = out_ref.shape[0]
    H = HIDDEN

    # ---- 1) Gather embedding rows for the whole sequence (scalar-indexed,
    #         token ids clamped in-kernel so an out-of-range id cannot read OOB).
    for t in range(T):                      # T is static; tiny unrolled loop
        idx = jnp.clip(tok_ref[t], 0, VOCAB - 1)
        x_scr[pl.ds(t, 1), :] = emb_ref[pl.ds(idx, 1), :]

    # ---- 2) One batched input-to-hidden matmul for all T steps (M=T fills the
    #         MXU sublanes), with all h-independent biases folded in.
    gi_scr[...] = (
        jnp.dot(x_scr[...].astype(jnp.bfloat16), w_ih_ref[...],
                preferred_element_type=jnp.float32)
        + b_all_ref[...]
    )

    # ---- 3) Serial GRU recurrence. Only the (1,H)@(H,3H) hidden matmul plus a
    #         handful of VPU/EUP ops remain per step; h is carried in vregs.
    w_hh = w_hh_ref[...]
    b_hn = b_hn_ref[...]

    def step(t, carry):
        h, h_bf = carry                                     # f32 / bf16 copies of hidden
        gi = gi_scr[pl.ds(t, 1), :]                         # (1, 3H) f32
        gh = jnp.dot(h_bf, w_hh,
                     preferred_element_type=jnp.float32)    # (1, 3H) f32
        # r, z gates: one lane-dense sigmoid over (1, 2H); biases already folded.
        rz = jax.nn.sigmoid(gi[:, :2 * H] + gh[:, :2 * H])
        r = rz[:, :H]
        z = rz[:, H:]
        # n gate (PyTorch form): tanh(W_in x + b_in + r * (W_hn h + b_hn))
        n = jnp.tanh(gi[:, 2 * H:] + r * (gh[:, 2 * H:] + b_hn))
        h_new = (1.0 - z) * n + z * h
        out_ref[pl.ds(t, 1), :] = h_new
        return (h_new, h_new.astype(jnp.bfloat16))

    h0 = h0_ref[...]
    lax.fori_loop(0, T, step, (h0, h0.astype(jnp.bfloat16)), unroll=True)


def encoder_rnn_forward(tokens, hidden, params):
    """tokens: int32 (T,); hidden: f32 (1,1,H) -> (outputs (T,1,H), hidden (1,1,H)).

    Equivalent to calling EncoderRNN.forward once per token, feeding the hidden
    state back (T=1 reproduces the module's single-step forward exactly).
    """
    emb_f32, w_ih_c, w_hh_c, b_all, b_hn = params
    T = tokens.shape[0]
    h0 = hidden.reshape(1, HIDDEN).astype(jnp.float32)

    grid_spec = pltpu.PrefetchScalarGridSpec(
        num_scalar_prefetch=1,
        grid=(1,),                            # whole sequence in one invocation
        in_specs=[
            pl.BlockSpec((VOCAB, HIDDEN), lambda i, tok: (0, 0)),          # emb table (resident)
            pl.BlockSpec((1, HIDDEN), lambda i, tok: (0, 0)),              # h0
            pl.BlockSpec((HIDDEN, 3 * HIDDEN), lambda i, tok: (0, 0)),     # W_ih
            pl.BlockSpec((HIDDEN, 3 * HIDDEN), lambda i, tok: (0, 0)),     # W_hh
            pl.BlockSpec((1, 3 * HIDDEN), lambda i, tok: (0, 0)),          # folded biases
            pl.BlockSpec((1, HIDDEN), lambda i, tok: (0, 0)),              # b_hn
        ],
        out_specs=pl.BlockSpec((T, HIDDEN), lambda i, tok: (0, 0)),        # dense output slab
        scratch_shapes=[
            pltpu.VMEM((T, HIDDEN), jnp.float32),        # gathered embeddings
            pltpu.VMEM((T, 3 * HIDDEN), jnp.float32),    # precomputed gi for all steps
        ],
    )

    outputs = pl.pallas_call(
        _encoder_gru_seq_kernel,
        out_shape=jax.ShapeDtypeStruct((T, HIDDEN), jnp.float32),
        grid_spec=grid_spec,
        compiler_params=pltpu.CompilerParams(
            dimension_semantics=("arbitrary",)),
    )(tokens, emb_f32, h0, w_ih_c, w_hh_c, b_all, b_hn)

    # TODO(synk): for v7x, batch independent sequences on a leading "parallel"
    # grid axis so the second TensorCore is used; single sequence uses one TC.
    outputs3 = outputs.reshape(T, 1, HIDDEN)
    hidden_out = outputs[T - 1].reshape(1, 1, HIDDEN)
    return outputs3, hidden_out


def init_params(key):
    """Deterministic parameter init matching PyTorch shapes (no checkpoint)."""
    ks = jax.random.split(key, 6)
    bound = 1.0 / jnp.sqrt(jnp.float32(HIDDEN))
    # nn.Embedding(input_size, hidden_size): (VOCAB, H), N(0,1)
    emb = jax.random.normal(ks[0], (VOCAB, HIDDEN), dtype=jnp.float32)
    # nn.GRU: weight_ih_l0 (3H, H), weight_hh_l0 (3H, H), biases (3H,), gate order r|z|n
    w_ih = jax.random.uniform(ks[1], (3 * HIDDEN, HIDDEN), jnp.float32, -bound, bound)
    w_hh = jax.random.uniform(ks[2], (3 * HIDDEN, HIDDEN), jnp.float32, -bound, bound)
    b_ih = jax.random.uniform(ks[3], (3 * HIDDEN,), jnp.float32, -bound, bound)
    b_hh = jax.random.uniform(ks[4], (3 * HIDDEN,), jnp.float32, -bound, bound)

    # Kernel layout:
    #  - embedding kept f32 (32 KiB, VMEM-resident; f32 keeps the dynamic row
    #    gather on the well-supported unpacked path)
    #  - weights pre-transposed & gate-concatenated on the lane axis: (H, 3H) bf16
    #  - all h-independent biases folded into one (1, 3H) vector added to the
    #    batched gi matmul; only b_hn stays separate (r multiplies it)
    w_ih_c = jnp.transpose(w_ih).astype(jnp.bfloat16)            # (H, 3H)
    w_hh_c = jnp.transpose(w_hh).astype(jnp.bfloat16)            # (H, 3H)
    b_all = jnp.concatenate(
        [b_ih[:2 * HIDDEN] + b_hh[:2 * HIDDEN], b_ih[2 * HIDDEN:]]
    ).reshape(1, 3 * HIDDEN)
    b_hn = b_hh[2 * HIDDEN:].reshape(1, HIDDEN)

    params = (emb, w_ih_c, w_hh_c, b_all, b_hn)
    raw = (emb, w_ih, w_hh, b_ih, b_hh)
    return params, raw, ks[5]


def reference_forward(tokens, hidden0, raw):
    """Pure-JAX reference mirroring torch.nn.GRU stepped over the sequence.

    GRU weights are rounded to bf16 (as in the kernel) but all arithmetic and
    the carried hidden state are f32, matching the kernel's numerics.
    """
    emb, w_ih, w_hh, b_ih, b_hh = raw
    w_ih_r = w_ih.astype(jnp.bfloat16).astype(jnp.float32)
    w_hh_r = w_hh.astype(jnp.bfloat16).astype(jnp.float32)

    h = hidden0.reshape(1, HIDDEN)
    outs = []
    for t in range(tokens.shape[0]):
        x = emb[tokens[t]].reshape(1, HIDDEN)
        x_bf = x.astype(jnp.bfloat16).astype(jnp.float32)
        h_bf = h.astype(jnp.bfloat16).astype(jnp.float32)
        gi = x_bf @ w_ih_r.T + b_ih
        gh = h_bf @ w_hh_r.T + b_hh
        gi_r, gi_z, gi_n = jnp.split(gi, 3, axis=1)
        gh_r, gh_z, gh_n = jnp.split(gh, 3, axis=1)
        r = jax.nn.sigmoid(gi_r + gh_r)
        z = jax.nn.sigmoid(gi_z + gh_z)
        n = jnp.tanh(gi_n + r * gh_n)
        h = (1.0 - z) * n + z * h
        outs.append(h)
    outputs = jnp.stack(outs).reshape(-1, 1, HIDDEN)
    return outputs, h.reshape(1, 1, HIDDEN)


if __name__ == "__main__":
    key = jax.random.PRNGKey(0)
    params, raw, tok_key = init_params(key)

    T = 8
    tokens = jax.random.randint(tok_key, (T,), 0, VOCAB, dtype=jnp.int32)
    hidden0 = jnp.zeros((1, 1, HIDDEN), dtype=jnp.float32)   # initHidden()

    out, hid = encoder_rnn_forward(tokens, hidden0, params)
    out = jax.block_until_ready(out)
    hid = jax.block_until_ready(hid)

    out_ref, hid_ref = reference_forward(tokens, hidden0, raw)
    assert out.shape == (T, 1, HIDDEN) and hid.shape == (1, 1, HIDDEN)
    # bf16 weights + f32 accumulation: only summation-order / transcendental
    # implementation differences vs the reference.
    assert jnp.allclose(out, out_ref, atol=5e-4, rtol=1e-4), "output mismatch vs reference"
    assert jnp.allclose(hid, hid_ref, atol=5e-4, rtol=1e-4), "hidden mismatch vs reference"

    print("KERNEL_OK")
</pallas_src>

<mosaic_0001>
module attributes {stable_mosaic.version = 11 : i64} {
  func.func @_encoder_gru_seq_kernel(%arg0: i32, %arg1: memref<8xi32, #tpu.memory_space<smem>>, %arg2: memref<64x128xf32, #tpu.memory_space<vmem>>, %arg3: memref<1x128xf32, #tpu.memory_space<vmem>>, %arg4: memref<128x384xbf16, #tpu.memory_space<vmem>>, %arg5: memref<128x384xbf16, #tpu.memory_space<vmem>>, %arg6: memref<1x384xf32, #tpu.memory_space<vmem>>, %arg7: memref<1x128xf32, #tpu.memory_space<vmem>>, %arg8: memref<8x128xf32, #tpu.memory_space<vmem>>, %arg9: memref<8x128xf32, #tpu.memory_space<vmem>>, %arg10: memref<8x384xf32, #tpu.memory_space<vmem>>) attributes {dimension_semantics = [#tpu.dimension_semantics<arbitrary>], iteration_bounds = array<i64: 1>, scalar_prefetch = 1 : i64, scratch_operands = 2 : i64, tpu.core_type = #tpu.core_type<tc>, window_params = [{pipeline_mode = #tpu.pipeline_mode<synchronous>, transform_indices = @transform_0, window_bounds = array<i64: 64, 128>}, {pipeline_mode = #tpu.pipeline_mode<synchronous>, transform_indices = @transform_1, window_bounds = array<i64: 1, 128>}, {pipeline_mode = #tpu.pipeline_mode<synchronous>, transform_indices = @transform_2, window_bounds = array<i64: 128, 384>}, {pipeline_mode = #tpu.pipeline_mode<synchronous>, transform_indices = @transform_3, window_bounds = array<i64: 128, 384>}, {pipeline_mode = #tpu.pipeline_mode<synchronous>, transform_indices = @transform_4, window_bounds = array<i64: 1, 384>}, {pipeline_mode = #tpu.pipeline_mode<synchronous>, transform_indices = @transform_5, window_bounds = array<i64: 1, 128>}, {pipeline_mode = #tpu.pipeline_mode<synchronous>, transform_indices = @transform_6, window_bounds = array<i64: 8, 128>}]} {
    %c0 = arith.constant 0 : index
    %0 = memref.load %arg1[%c0] : memref<8xi32, #tpu.memory_space<smem>>
    %c0_i32 = arith.constant 0 : i32
    %c63_i32 = arith.constant 63 : i32
    %1 = arith.maxsi %c0_i32, %0 : i32
    %2 = arith.minsi %c63_i32, %1 : i32
    %3 = arith.index_cast %2 : i32 to index
    %c0_0 = arith.constant 0 : index
    %4 = vector.load %arg2[%3, %c0_0] : memref<64x128xf32, #tpu.memory_space<vmem>>, vector<1x128xf32>
    %c0_1 = arith.constant 0 : index
    %c0_2 = arith.constant 0 : index
    %5 = vector.load %arg9[%c0_1, %c0_2] : memref<8x128xf32, #tpu.memory_space<vmem>>, vector<1x128xf32>
    tpu.vector_store %arg9[%c0_1, %c0_2], %4 {strides = array<i32>} : memref<8x128xf32, #tpu.memory_space<vmem>>, vector<1x128xf32>,
    %c1 = arith.constant 1 : index
    %6 = memref.load %arg1[%c1] : memref<8xi32, #tpu.memory_space<smem>>
    %c0_i32_3 = arith.constant 0 : i32
    %c63_i32_4 = arith.constant 63 : i32
    %7 = arith.maxsi %c0_i32_3, %6 : i32
    %8 = arith.minsi %c63_i32_4, %7 : i32
    %9 = arith.index_cast %8 : i32 to index
    %c0_5 = arith.constant 0 : index
    %10 = vector.load %arg2[%9, %c0_5] : memref<64x128xf32, #tpu.memory_space<vmem>>, vector<1x128xf32>
    %c1_6 = arith.constant 1 : index
    %c0_7 = arith.constant 0 : index
    %11 = vector.load %arg9[%c1_6, %c0_7] : memref<8x128xf32, #tpu.memory_space<vmem>>, vector<1x128xf32>
    tpu.vector_store %arg9[%c1_6, %c0_7], %10 {strides = array<i32>} : memref<8x128xf32, #tpu.memory_space<vmem>>, vector<1x128xf32>,
    %c2 = arith.constant 2 : index
    %12 = memref.load %arg1[%c2] : memref<8xi32, #tpu.memory_space<smem>>
    %c0_i32_8 = arith.constant 0 : i32
    %c63_i32_9 = arith.constant 63 : i32
    %13 = arith.maxsi %c0_i32_8, %12 : i32
    %14 = arith.minsi %c63_i32_9, %13 : i32
    %15 = arith.index_cast %14 : i32 to index
    %c0_10 = arith.constant 0 : index
    %16 = vector.load %arg2[%15, %c0_10] : memref<64x128xf32, #tpu.memory_space<vmem>>, vector<1x128xf32>
    %c2_11 = arith.constant 2 : index
    %c0_12 = arith.constant 0 : index
    %17 = vector.load %arg9[%c2_11, %c0_12] : memref<8x128xf32, #tpu.memory_space<vmem>>, vector<1x128xf32>
    tpu.vector_store %arg9[%c2_11, %c0_12], %16 {strides = array<i32>} : memref<8x128xf32, #tpu.memory_space<vmem>>, vector<1x128xf32>,
    %c3 = arith.constant 3 : index
    %18 = memref.load %arg1[%c3] : memref<8xi32, #tpu.memory_space<smem>>
    %c0_i32_13 = arith.constant 0 : i32
    %c63_i32_14 = arith.constant 63 : i32
    %19 = arith.maxsi %c0_i32_13, %18 : i32
    %20 = arith.minsi %c63_i32_14, %19 : i32
    %21 = arith.index_cast %20 : i32 to index
    %c0_15 = arith.constant 0 : index
    %22 = vector.load %arg2[%21, %c0_15] : memref<64x128xf32, #tpu.memory_space<vmem>>, vector<1x128xf32>
    %c3_16 = arith.constant 3 : index
    %c0_17 = arith.constant 0 : index
    %23 = vector.load %arg9[%c3_16, %c0_17] : memref<8x128xf32, #tpu.memory_space<vmem>>, vector<1x128xf32>
    tpu.vector_store %arg9[%c3_16, %c0_17], %22 {strides = array<i32>} : memref<8x128xf32, #tpu.memory_space<vmem>>, vector<1x128xf32>,
    %c4 = arith.constant 4 : index
    %24 = memref.load %arg1[%c4] : memref<8xi32, #tpu.memory_space<smem>>
    %c0_i32_18 = arith.constant 0 : i32
    %c63_i32_19 = arith.constant 63 : i32
    %25 = arith.maxsi %c0_i32_18, %24 : i32
    %26 = arith.minsi %c63_i32_19, %25 : i32
    %27 = arith.index_cast %26 : i32 to index
    %c0_20 = arith.constant 0 : index
    %28 = vector.load %arg2[%27, %c0_20] : memref<64x128xf32, #tpu.memory_space<vmem>>, vector<1x128xf32>
    %c4_21 = arith.constant 4 : index
    %c0_22 = arith.constant 0 : index
    %29 = vector.load %arg9[%c4_21, %c0_22] : memref<8x128xf32, #tpu.memory_space<vmem>>, vector<1x128xf32>
    tpu.vector_store %arg9[%c4_21, %c0_22], %28 {strides = array<i32>} : memref<8x128xf32, #tpu.memory_space<vmem>>, vector<1x128xf32>,
    %c5 = arith.constant 5 : index
    %30 = memref.load %arg1[%c5] : memref<8xi32, #tpu.memory_space<smem>>
    %c0_i32_23 = arith.constant 0 : i32
    %c63_i32_24 = arith.constant 63 : i32
    %31 = arith.maxsi %c0_i32_23, %30 : i32
    %32 = arith.minsi %c63_i32_24, %31 : i32
    %33 = arith.index_cast %32 : i32 to index
    %c0_25 = arith.constant 0 : index
    %34 = vector.load %arg2[%33, %c0_25] : memref<64x128xf32, #tpu.memory_space<vmem>>, vector<1x128xf32>
    %c5_26 = arith.constant 5 : index
    %c0_27 = arith.constant 0 : index
    %35 = vector.load %arg9[%c5_26, %c0_27] : memref<8x128xf32, #tpu.memory_space<vmem>>, vector<1x128xf32>
    tpu.vector_store %arg9[%c5_26, %c0_27], %34 {strides = array<i32>} : memref<8x128xf32, #tpu.memory_space<vmem>>, vector<1x128xf32>,
    %c6 = arith.constant 6 : index
    %36 = memref.load %arg1[%c6] : memref<8xi32, #tpu.memory_space<smem>>
    %c0_i32_28 = arith.constant 0 : i32
    %c63_i32_29 = arith.constant 63 : i32
    %37 = arith.maxsi %c0_i32_28, %36 : i32
    %38 = arith.minsi %c63_i32_29, %37 : i32
    %39 = arith.index_cast %38 : i32 to index
    %c0_30 = arith.constant 0 : index
    %40 = vector.load %arg2[%39, %c0_30] : memref<64x128xf32, #tpu.memory_space<vmem>>, vector<1x128xf32>
    %c6_31 = arith.constant 6 : index
    %c0_32 = arith.constant 0 : index
    %41 = vector.load %arg9[%c6_31, %c0_32] : memref<8x128xf32, #tpu.memory_space<vmem>>, vector<1x128xf32>
    tpu.vector_store %arg9[%c6_31, %c0_32], %40 {strides = array<i32>} : memref<8x128xf32, #tpu.memory_space<vmem>>, vector<1x128xf32>,
    %c7 = arith.constant 7 : index
    %42 = memref.load %arg1[%c7] : memref<8xi32, #tpu.memory_space<smem>>
    %c0_i32_33 = arith.constant 0 : i32
    %c63_i32_34 = arith.constant 63 : i32
    %43 = arith.maxsi %c0_i32_33, %42 : i32
    %44 = arith.minsi %c63_i32_34, %43 : i32
    %45 = arith.index_cast %44 : i32 to index
    %c0_35 = arith.constant 0 : index
    %46 = vector.load %arg2[%45, %c0_35] : memref<64x128xf32, #tpu.memory_space<vmem>>, vector<1x128xf32>
    %c7_36 = arith.constant 7 : index
    %c0_37 = arith.constant 0 : index
    %47 = vector.load %arg9[%c7_36, %c0_37] : memref<8x128xf32, #tpu.memory_space<vmem>>, vector<1x128xf32>
    tpu.vector_store %arg9[%c7_36, %c0_37], %46 {strides = array<i32>} : memref<8x128xf32, #tpu.memory_space<vmem>>, vector<1x128xf32>,
    %c0_38 = arith.constant 0 : index
    %c0_39 = arith.constant 0 : index
    %48 = vector.load %arg9[%c0_38, %c0_39] : memref<8x128xf32, #tpu.memory_space<vmem>>, vector<8x128xf32>
    %49 = arith.truncf %48 : vector<8x128xf32> to vector<8x128xbf16>
    %c0_40 = arith.constant 0 : index
    %c0_41 = arith.constant 0 : index
    %50 = vector.load %arg4[%c0_40, %c0_41] : memref<128x384xbf16, #tpu.memory_space<vmem>>, vector<128x384xbf16>
    %cst = arith.constant dense<0.000000e+00> : vector<8x384xf32>
    %51 = tpu.matmul %49, %50, %cst {dimension_numbers = #tpu.dot_dimension_numbers<[1], [0], [0], [1], [0, 0, 1, 1], [], []>} : vector<8x128xbf16>, vector<128x384xbf16>, vector<8x384xf32> -> vector<8x384xf32>
    %c0_42 = arith.constant 0 : index
    %c0_43 = arith.constant 0 : index
    %52 = vector.load %arg6[%c0_42, %c0_43] : memref<1x384xf32, #tpu.memory_space<vmem>>, vector<1x384xf32>
    %53 = vector.broadcast %52 : vector<1x384xf32> to vector<8x384xf32>
    %54 = arith.addf %51, %53 : vector<8x384xf32>
    %c0_44 = arith.constant 0 : index
    %c0_45 = arith.constant 0 : index
    %55 = vector.load %arg10[%c0_44, %c0_45] : memref<8x384xf32, #tpu.memory_space<vmem>>, vector<8x384xf32>
    tpu.vector_store %arg10[%c0_44, %c0_45], %54 {strides = array<i32>} : memref<8x384xf32, #tpu.memory_space<vmem>>, vector<8x384xf32>,
    %c0_46 = arith.constant 0 : index
    %c0_47 = arith.constant 0 : index
    %56 = vector.load %arg5[%c0_46, %c0_47] : memref<128x384xbf16, #tpu.memory_space<vmem>>, vector<128x384xbf16>
    %c0_48 = arith.constant 0 : index
    %c0_49 = arith.constant 0 : index
    %57 = vector.load %arg7[%c0_48, %c0_49] : memref<1x128xf32, #tpu.memory_space<vmem>>, vector<1x128xf32>
    %c0_50 = arith.constant 0 : index
    %c0_51 = arith.constant 0 : index
    %58 = vector.load %arg3[%c0_50, %c0_51] : memref<1x128xf32, #tpu.memory_space<vmem>>, vector<1x128xf32>
    %59 = arith.truncf %58 : vector<1x128xf32> to vector<1x128xbf16>
    %c0_i32_52 = arith.constant 0 : i32
    %60 = arith.index_cast %c0_i32_52 : i32 to index
    %c0_53 = arith.constant 0 : index
    %61 = vector.load %arg10[%60, %c0_53] : memref<8x384xf32, #tpu.memory_space<vmem>>, vector<1x384xf32>
    %cst_54 = arith.constant dense<0.000000e+00> : vector<1x384xf32>
    %62 = tpu.matmul %59, %56, %cst_54 {dimension_numbers = #tpu.dot_dimension_numbers<[1], [0], [0], [1], [0, 0, 1, 1], [], []>} : vector<1x128xbf16>, vector<128x384xbf16>, vector<1x384xf32> -> vector<1x384xf32>
    %63 = vector.extract_strided_slice %61 {offsets = [0, 0], sizes = [1, 256], strides = [1, 1]} : vector<1x384xf32> to vector<1x256xf32>
    %64 = vector.extract_strided_slice %62 {offsets = [0, 0], sizes = [1, 256], strides = [1, 1]} : vector<1x384xf32> to vector<1x256xf32>
    %65 = arith.addf %63, %64 : vector<1x256xf32>
    %66 = arith.negf %65 : vector<1x256xf32>
    %67 = math.exp %66 : vector<1x256xf32>
    %cst_55 = arith.constant 1.000000e+00 : f32
    %68 = vector.broadcast %cst_55 : f32 to vector<1x256xf32>
    %69 = arith.addf %68, %67 : vector<1x256xf32>
    %70 = arith.divf %68, %69 : vector<1x256xf32>
    %71 = vector.extract_strided_slice %70 {offsets = [0, 0], sizes = [1, 128], strides = [1, 1]} : vector<1x256xf32> to vector<1x128xf32>
    %72 = vector.extract_strided_slice %70 {offsets = [0, 128], sizes = [1, 128], strides = [1, 1]} : vector<1x256xf32> to vector<1x128xf32>
    %73 = vector.extract_strided_slice %61 {offsets = [0, 256], sizes = [1, 128], strides = [1, 1]} : vector<1x384xf32> to vector<1x128xf32>
    %74 = vector.extract_strided_slice %62 {offsets = [0, 256], sizes = [1, 128], strides = [1, 1]} : vector<1x384xf32> to vector<1x128xf32>
    %75 = arith.addf %74, %57 : vector<1x128xf32>
    %76 = arith.mulf %71, %75 : vector<1x128xf32>
    %77 = arith.addf %73, %76 : vector<1x128xf32>
    %78 = math.tanh %77 : vector<1x128xf32>
    %cst_56 = arith.constant 1.000000e+00 : f32
    %79 = vector.broadcast %cst_56 : f32 to vector<1x128xf32>
    %80 = arith.subf %79, %72 : vector<1x128xf32>
    %81 = arith.mulf %80, %78 : vector<1x128xf32>
    %82 = arith.mulf %72, %58 : vector<1x128xf32>
    %83 = arith.addf %81, %82 : vector<1x128xf32>
    %84 = arith.index_cast %c0_i32_52 : i32 to index
    %c0_57 = arith.constant 0 : index
    %85 = vector.load %arg8[%84, %c0_57] : memref<8x128xf32, #tpu.memory_space<vmem>>, vector<1x128xf32>
    tpu.vector_store %arg8[%84, %c0_57], %83 {strides = array<i32>} : memref<8x128xf32, #tpu.memory_space<vmem>>, vector<1x128xf32>,
    %86 = arith.truncf %83 : vector<1x128xf32> to vector<1x128xbf16>
    %c1_i32 = arith.constant 1 : i32
    %87 = arith.index_cast %c1_i32 : i32 to index
    %c0_58 = arith.constant 0 : index
    %88 = vector.load %arg10[%87, %c0_58] : memref<8x384xf32, #tpu.memory_space<vmem>>, vector<1x384xf32>
    %cst_59 = arith.constant dense<0.000000e+00> : vector<1x384xf32>
    %89 = tpu.matmul %86, %56, %cst_59 {dimension_numbers = #tpu.dot_dimension_numbers<[1], [0], [0], [1], [0, 0, 1, 1], [], []>} : vector<1x128xbf16>, vector<128x384xbf16>, vector<1x384xf32> -> vector<1x384xf32>
    %90 = vector.extract_strided_slice %88 {offsets = [0, 0], sizes = [1, 256], strides = [1, 1]} : vector<1x384xf32> to vector<1x256xf32>
    %91 = vector.extract_strided_slice %89 {offsets = [0, 0], sizes = [1, 256], strides = [1, 1]} : vector<1x384xf32> to vector<1x256xf32>
    %92 = arith.addf %90, %91 : vector<1x256xf32>
    %93 = arith.negf %92 : vector<1x256xf32>
    %94 = math.exp %93 : vector<1x256xf32>
    %cst_60 = arith.constant 1.000000e+00 : f32
    %95 = vector.broadcast %cst_60 : f32 to vector<1x256xf32>
    %96 = arith.addf %95, %94 : vector<1x256xf32>
    %97 = arith.divf %95, %96 : vector<1x256xf32>
    %98 = vector.extract_strided_slice %97 {offsets = [0, 0], sizes = [1, 128], strides = [1, 1]} : vector<1x256xf32> to vector<1x128xf32>
    %99 = vector.extract_strided_slice %97 {offsets = [0, 128], sizes = [1, 128], strides = [1, 1]} : vector<1x256xf32> to vector<1x128xf32>
    %100 = vector.extract_strided_slice %88 {offsets = [0, 256], sizes = [1, 128], strides = [1, 1]} : vector<1x384xf32> to vector<1x128xf32>
    %101 = vector.extract_strided_slice %89 {offsets = [0, 256], sizes = [1, 128], strides = [1, 1]} : vector<1x384xf32> to vector<1x128xf32>
    %102 = arith.addf %101, %57 : vector<1x128xf32>
    %103 = arith.mulf %98, %102 : vector<1x128xf32>
    %104 = arith.addf %100, %103 : vector<1x128xf32>
    %105 = math.tanh %104 : vector<1x128xf32>
    %cst_61 = arith.constant 1.000000e+00 : f32
    %106 = vector.broadcast %cst_61 : f32 to vector<1x128xf32>
    %107 = arith.subf %106, %99 : vector<1x128xf32>
    %108 = arith.mulf %107, %105 : vector<1x128xf32>
    %109 = arith.mulf %99, %83 : vector<1x128xf32>
    %110 = arith.addf %108, %109 : vector<1x128xf32>
    %111 = arith.index_cast %c1_i32 : i32 to index
    %c0_62 = arith.constant 0 : index
    %112 = vector.load %arg8[%111, %c0_62] : memref<8x128xf32, #tpu.memory_space<vmem>>, vector<1x128xf32>
    tpu.vector_store %arg8[%111, %c0_62], %110 {strides = array<i32>} : memref<8x128xf32, #tpu.memory_space<vmem>>, vector<1x128xf32>,
    %113 = arith.truncf %110 : vector<1x128xf32> to vector<1x128xbf16>
    %c2_i32 = arith.constant 2 : i32
    %114 = arith.index_cast %c2_i32 : i32 to index
    %c0_63 = arith.constant 0 : index
    %115 = vector.load %arg10[%114, %c0_63] : memref<8x384xf32, #tpu.memory_space<vmem>>, vector<1x384xf32>
    %cst_64 = arith.constant dense<0.000000e+00> : vector<1x384xf32>
    %116 = tpu.matmul %113, %56, %cst_64 {dimension_numbers = #tpu.dot_dimension_numbers<[1], [0], [0], [1], [0, 0, 1, 1], [], []>} : vector<1x128xbf16>, vector<128x384xbf16>, vector<1x384xf32> -> vector<1x384xf32>
    %117 = vector.extract_strided_slice %115 {offsets = [0, 0], sizes = [1, 256], strides = [1, 1]} : vector<1x384xf32> to vector<1x256xf32>
    %118 = vector.extract_strided_slice %116 {offsets = [0, 0], sizes = [1, 256], strides = [1, 1]} : vector<1x384xf32> to vector<1x256xf32>
    %119 = arith.addf %117, %118 : vector<1x256xf32>
    %120 = arith.negf %119 : vector<1x256xf32>
    %121 = math.exp %120 : vector<1x256xf32>
    %cst_65 = arith.constant 1.000000e+00 : f32
    %122 = vector.broadcast %cst_65 : f32 to vector<1x256xf32>
    %123 = arith.addf %122, %121 : vector<1x256xf32>
    %124 = arith.divf %122, %123 : vector<1x256xf32>
    %125 = vector.extract_strided_slice %124 {offsets = [0, 0], sizes = [1, 128], strides = [1, 1]} : vector<1x256xf32> to vector<1x128xf32>
    %126 = vector.extract_strided_slice %124 {offsets = [0, 128], sizes = [1, 128], strides = [1, 1]} : vector<1x256xf32> to vector<1x128xf32>
    %127 = vector.extract_strided_slice %115 {offsets = [0, 256], sizes = [1, 128], strides = [1, 1]} : vector<1x384xf32> to vector<1x128xf32>
    %128 = vector.extract_strided_slice %116 {offsets = [0, 256], sizes = [1, 128], strides = [1, 1]} : vector<1x384xf32> to vector<1x128xf32>
    %129 = arith.addf %128, %57 : vector<1x128xf32>
    %130 = arith.mulf %125, %129 : vector<1x128xf32>
    %131 = arith.addf %127, %130 : vector<1x128xf32>
    %132 = math.tanh %131 : vector<1x128xf32>
    %cst_66 = arith.constant 1.000000e+00 : f32
    %133 = vector.broadcast %cst_66 : f32 to vector<1x128xf32>
    %134 = arith.subf %133, %126 : vector<1x128xf32>
    %135 = arith.mulf %134, %132 : vector<1x128xf32>
    %136 = arith.mulf %126, %110 : vector<1x128xf32>
    %137 = arith.addf %135, %136 : vector<1x128xf32>
    %138 = arith.index_cast %c2_i32 : i32 to index
    %c0_67 = arith.constant 0 : index
    %139 = vector.load %arg8[%138, %c0_67] : memref<8x128xf32, #tpu.memory_space<vmem>>, vector<1x128xf32>
    tpu.vector_store %arg8[%138, %c0_67], %137 {strides = array<i32>} : memref<8x128xf32, #tpu.memory_space<vmem>>, vector<1x128xf32>,
    %140 = arith.truncf %137 : vector<1x128xf32> to vector<1x128xbf16>
    %c3_i32 = arith.constant 3 : i32
    %141 = arith.index_cast %c3_i32 : i32 to index
    %c0_68 = arith.constant 0 : index
    %142 = vector.load %arg10[%141, %c0_68] : memref<8x384xf32, #tpu.memory_space<vmem>>, vector<1x384xf32>
    %cst_69 = arith.constant dense<0.000000e+00> : vector<1x384xf32>
    %143 = tpu.matmul %140, %56, %cst_69 {dimension_numbers = #tpu.dot_dimension_numbers<[1], [0], [0], [1], [0, 0, 1, 1], [], []>} : vector<1x128xbf16>, vector<128x384xbf16>, vector<1x384xf32> -> vector<1x384xf32>
    %144 = vector.extract_strided_slice %142 {offsets = [0, 0], sizes = [1, 256], strides = [1, 1]} : vector<1x384xf32> to vector<1x256xf32>
    %145 = vector.extract_strided_slice %143 {offsets = [0, 0], sizes = [1, 256], strides = [1, 1]} : vector<1x384xf32> to vector<1x256xf32>
    %146 = arith.addf %144, %145 : vector<1x256xf32>
    %147 = arith.negf %146 : vector<1x256xf32>
    %148 = math.exp %147 : vector<1x256xf32>
    %cst_70 = arith.constant 1.000000e+00 : f32
    %149 = vector.broadcast %cst_70 : f32 to vector<1x256xf32>
    %150 = arith.addf %149, %148 : vector<1x256xf32>
    %151 = arith.divf %149, %150 : vector<1x256xf32>
    %152 = vector.extract_strided_slice %151 {offsets = [0, 0], sizes = [1, 128], strides = [1, 1]} : vector<1x256xf32> to vector<1x128xf32>
    %153 = vector.extract_strided_slice %151 {offsets = [0, 128], sizes = [1, 128], strides = [1, 1]} : vector<1x256xf32> to vector<1x128xf32>
    %154 = vector.extract_strided_slice %142 {offsets = [0, 256], sizes = [1, 128], strides = [1, 1]} : vector<1x384xf32> to vector<1x128xf32>
    %155 = vector.extract_strided_slice %143 {offsets = [0, 256], sizes = [1, 128], strides = [1, 1]} : vector<1x384xf32> to vector<1x128xf32>
    %156 = arith.addf %155, %57 : vector<1x128xf32>
    %157 = arith.mulf %152, %156 : vector<1x128xf32>
    %158 = arith.addf %154, %157 : vector<1x128xf32>
    %159 = math.tanh %158 : vector<1x128xf32>
    %cst_71 = arith.constant 1.000000e+00 : f32
    %160 = vector.broadcast %cst_71 : f32 to vector<1x128xf32>
    %161 = arith.subf %160, %153 : vector<1x128xf32>
    %162 = arith.mulf %161, %159 : vector<1x128xf32>
    %163 = arith.mulf %153, %137 : vector<1x128xf32>
    %164 = arith.addf %162, %163 : vector<1x128xf32>
    %165 = arith.index_cast %c3_i32 : i32 to index
    %c0_72 = arith.constant 0 : index
    %166 = vector.load %arg8[%165, %c0_72] : memref<8x128xf32, #tpu.memory_space<vmem>>, vector<1x128xf32>
    tpu.vector_store %arg8[%165, %c0_72], %164 {strides = array<i32>} : memref<8x128xf32, #tpu.memory_space<vmem>>, vector<1x128xf32>,
    %167 = arith.truncf %164 : vector<1x128xf32> to vector<1x128xbf16>
    %c4_i32 = arith.constant 4 : i32
    %168 = arith.index_cast %c4_i32 : i32 to index
    %c0_73 = arith.constant 0 : index
    %169 = vector.load %arg10[%168, %c0_73] : memref<8x384xf32, #tpu.memory_space<vmem>>, vector<1x384xf32>
    %cst_74 = arith.constant dense<0.000000e+00> : vector<1x384xf32>
    %170 = tpu.matmul %167, %56, %cst_74 {dimension_numbers = #tpu.dot_dimension_numbers<[1], [0], [0], [1], [0, 0, 1, 1], [], []>} : vector<1x128xbf16>, vector<128x384xbf16>, vector<1x384xf32> -> vector<1x384xf32>
    %171 = vector.extract_strided_slice %169 {offsets = [0, 0], sizes = [1, 256], strides = [1, 1]} : vector<1x384xf32> to vector<1x256xf32>
    %172 = vector.extract_strided_slice %170 {offsets = [0, 0], sizes = [1, 256], strides = [1, 1]} : vector<1x384xf32> to vector<1x256xf32>
    %173 = arith.addf %171, %172 : vector<1x256xf32>
    %174 = arith.negf %173 : vector<1x256xf32>
    %175 = math.exp %174 : vector<1x256xf32>
    %cst_75 = arith.constant 1.000000e+00 : f32
    %176 = vector.broadcast %cst_75 : f32 to vector<1x256xf32>
    %177 = arith.addf %176, %175 : vector<1x256xf32>
    %178 = arith.divf %176, %177 : vector<1x256xf32>
    %179 = vector.extract_strided_slice %178 {offsets = [0, 0], sizes = [1, 128], strides = [1, 1]} : vector<1x256xf32> to vector<1x128xf32>
    %180 = vector.extract_strided_slice %178 {offsets = [0, 128], sizes = [1, 128], strides = [1, 1]} : vector<1x256xf32> to vector<1x128xf32>
    %181 = vector.extract_strided_slice %169 {offsets = [0, 256], sizes = [1, 128], strides = [1, 1]} : vector<1x384xf32> to vector<1x128xf32>
    %182 = vector.extract_strided_slice %170 {offsets = [0, 256], sizes = [1, 128], strides = [1, 1]} : vector<1x384xf32> to vector<1x128xf32>
    %183 = arith.addf %182, %57 : vector<1x128xf32>
    %184 = arith.mulf %179, %183 : vector<1x128xf32>
    %185 = arith.addf %181, %184 : vector<1x128xf32>
    %186 = math.tanh %185 : vector<1x128xf32>
    %cst_76 = arith.constant 1.000000e+00 : f32
    %187 = vector.broadcast %cst_76 : f32 to vector<1x128xf32>
    %188 = arith.subf %187, %180 : vector<1x128xf32>
    %189 = arith.mulf %188, %186 : vector<1x128xf32>
    %190 = arith.mulf %180, %164 : vector<1x128xf32>
    %191 = arith.addf %189, %190 : vector<1x128xf32>
    %192 = arith.index_cast %c4_i32 : i32 to index
    %c0_77 = arith.constant 0 : index
    %193 = vector.load %arg8[%192, %c0_77] : memref<8x128xf32, #tpu.memory_space<vmem>>, vector<1x128xf32>
    tpu.vector_store %arg8[%192, %c0_77], %191 {strides = array<i32>} : memref<8x128xf32, #tpu.memory_space<vmem>>, vector<1x128xf32>,
    %194 = arith.truncf %191 : vector<1x128xf32> to vector<1x128xbf16>
    %c5_i32 = arith.constant 5 : i32
    %195 = arith.index_cast %c5_i32 : i32 to index
    %c0_78 = arith.constant 0 : index
    %196 = vector.load %arg10[%195, %c0_78] : memref<8x384xf32, #tpu.memory_space<vmem>>, vector<1x384xf32>
    %cst_79 = arith.constant dense<0.000000e+00> : vector<1x384xf32>
    %197 = tpu.matmul %194, %56, %cst_79 {dimension_numbers = #tpu.dot_dimension_numbers<[1], [0], [0], [1], [0, 0, 1, 1], [], []>} : vector<1x128xbf16>, vector<128x384xbf16>, vector<1x384xf32> -> vector<1x384xf32>
    %198 = vector.extract_strided_slice %196 {offsets = [0, 0], sizes = [1, 256], strides = [1, 1]} : vector<1x384xf32> to vector<1x256xf32>
    %199 = vector.extract_strided_slice %197 {offsets = [0, 0], sizes = [1, 256], strides = [1, 1]} : vector<1x384xf32> to vector<1x256xf32>
    %200 = arith.addf %198, %199 : vector<1x256xf32>
    %201 = arith.negf %200 : vector<1x256xf32>
    %202 = math.exp %201 : vector<1x256xf32>
    %cst_80 = arith.constant 1.000000e+00 : f32
    %203 = vector.broadcast %cst_80 : f32 to vector<1x256xf32>
    %204 = arith.addf %203, %202 : vector<1x256xf32>
    %205 = arith.divf %203, %204 : vector<1x256xf32>
    %206 = vector.extract_strided_slice %205 {offsets = [0, 0], sizes = [1, 128], strides = [1, 1]} : vector<1x256xf32> to vector<1x128xf32>
    %207 = vector.extract_strided_slice %205 {offsets = [0, 128], sizes = [1, 128], strides = [1, 1]} : vector<1x256xf32> to vector<1x128xf32>
    %208 = vector.extract_strided_slice %196 {offsets = [0, 256], sizes = [1, 128], strides = [1, 1]} : vector<1x384xf32> to vector<1x128xf32>
    %209 = vector.extract_strided_slice %197 {offsets = [0, 256], sizes = [1, 128], strides = [1, 1]} : vector<1x384xf32> to vector<1x128xf32>
    %210 = arith.addf %209, %57 : vector<1x128xf32>
    %211 = arith.mulf %206, %210 : vector<1x128xf32>
    %212 = arith.addf %208, %211 : vector<1x128xf32>
    %213 = math.tanh %212 : vector<1x128xf32>
    %cst_81 = arith.constant 1.000000e+00 : f32
    %214 = vector.broadcast %cst_81 : f32 to vector<1x128xf32>
    %215 = arith.subf %214, %207 : vector<1x128xf32>
    %216 = arith.mulf %215, %213 : vector<1x128xf32>
    %217 = arith.mulf %207, %191 : vector<1x128xf32>
    %218 = arith.addf %216, %217 : vector<1x128xf32>
    %219 = arith.index_cast %c5_i32 : i32 to index
    %c0_82 = arith.constant 0 : index
    %220 = vector.load %arg8[%219, %c0_82] : memref<8x128xf32, #tpu.memory_space<vmem>>, vector<1x128xf32>
    tpu.vector_store %arg8[%219, %c0_82], %218 {strides = array<i32>} : memref<8x128xf32, #tpu.memory_space<vmem>>, vector<1x128xf32>,
    %221 = arith.truncf %218 : vector<1x128xf32> to vector<1x128xbf16>
    %c6_i32 = arith.constant 6 : i32
    %222 = arith.index_cast %c6_i32 : i32 to index
    %c0_83 = arith.constant 0 : index
    %223 = vector.load %arg10[%222, %c0_83] : memref<8x384xf32, #tpu.memory_space<vmem>>, vector<1x384xf32>
    %cst_84 = arith.constant dense<0.000000e+00> : vector<1x384xf32>
    %224 = tpu.matmul %221, %56, %cst_84 {dimension_numbers = #tpu.dot_dimension_numbers<[1], [0], [0], [1], [0, 0, 1, 1], [], []>} : vector<1x128xbf16>, vector<128x384xbf16>, vector<1x384xf32> -> vector<1x384xf32>
    %225 = vector.extract_strided_slice %223 {offsets = [0, 0], sizes = [1, 256], strides = [1, 1]} : vector<1x384xf32> to vector<1x256xf32>
    %226 = vector.extract_strided_slice %224 {offsets = [0, 0], sizes = [1, 256], strides = [1, 1]} : vector<1x384xf32> to vector<1x256xf32>
    %227 = arith.addf %225, %226 : vector<1x256xf32>
    %228 = arith.negf %227 : vector<1x256xf32>
    %229 = math.exp %228 : vector<1x256xf32>
    %cst_85 = arith.constant 1.000000e+00 : f32
    %230 = vector.broadcast %cst_85 : f32 to vector<1x256xf32>
    %231 = arith.addf %230, %229 : vector<1x256xf32>
    %232 = arith.divf %230, %231 : vector<1x256xf32>
    %233 = vector.extract_strided_slice %232 {offsets = [0, 0], sizes = [1, 128], strides = [1, 1]} : vector<1x256xf32> to vector<1x128xf32>
    %234 = vector.extract_strided_slice %232 {offsets = [0, 128], sizes = [1, 128], strides = [1, 1]} : vector<1x256xf32> to vector<1x128xf32>
    %235 = vector.extract_strided_slice %223 {offsets = [0, 256], sizes = [1, 128], strides = [1, 1]} : vector<1x384xf32> to vector<1x128xf32>
    %236 = vector.extract_strided_slice %224 {offsets = [0, 256], sizes = [1, 128], strides = [1, 1]} : vector<1x384xf32> to vector<1x128xf32>
    %237 = arith.addf %236, %57 : vector<1x128xf32>
    %238 = arith.mulf %233, %237 : vector<1x128xf32>
    %239 = arith.addf %235, %238 : vector<1x128xf32>
    %240 = math.tanh %239 : vector<1x128xf32>
    %cst_86 = arith.constant 1.000000e+00 : f32
    %241 = vector.broadcast %cst_86 : f32 to vector<1x128xf32>
    %242 = arith.subf %241, %234 : vector<1x128xf32>
    %243 = arith.mulf %242, %240 : vector<1x128xf32>
    %244 = arith.mulf %234, %218 : vector<1x128xf32>
    %245 = arith.addf %243, %244 : vector<1x128xf32>
    %246 = arith.index_cast %c6_i32 : i32 to index
    %c0_87 = arith.constant 0 : index
    %247 = vector.load %arg8[%246, %c0_87] : memref<8x128xf32, #tpu.memory_space<vmem>>, vector<1x128xf32>
    tpu.vector_store %arg8[%246, %c0_87], %245 {strides = array<i32>} : memref<8x128xf32, #tpu.memory_space<vmem>>, vector<1x128xf32>,
    %248 = arith.truncf %245 : vector<1x128xf32> to vector<1x128xbf16>
    %c7_i32 = arith.constant 7 : i32
    %249 = arith.index_cast %c7_i32 : i32 to index
    %c0_88 = arith.constant 0 : index
    %250 = vector.load %arg10[%249, %c0_88] : memref<8x384xf32, #tpu.memory_space<vmem>>, vector<1x384xf32>
    %cst_89 = arith.constant dense<0.000000e+00> : vector<1x384xf32>
    %251 = tpu.matmul %248, %56, %cst_89 {dimension_numbers = #tpu.dot_dimension_numbers<[1], [0], [0], [1], [0, 0, 1, 1], [], []>} : vector<1x128xbf16>, vector<128x384xbf16>, vector<1x384xf32> -> vector<1x384xf32>
    %252 = vector.extract_strided_slice %250 {offsets = [0, 0], sizes = [1, 256], strides = [1, 1]} : vector<1x384xf32> to vector<1x256xf32>
    %253 = vector.extract_strided_slice %251 {offsets = [0, 0], sizes = [1, 256], strides = [1, 1]} : vector<1x384xf32> to vector<1x256xf32>
    %254 = arith.addf %252, %253 : vector<1x256xf32>
    %255 = arith.negf %254 : vector<1x256xf32>
    %256 = math.exp %255 : vector<1x256xf32>
    %cst_90 = arith.constant 1.000000e+00 : f32
    %257 = vector.broadcast %cst_90 : f32 to vector<1x256xf32>
    %258 = arith.addf %257, %256 : vector<1x256xf32>
    %259 = arith.divf %257, %258 : vector<1x256xf32>
    %260 = vector.extract_strided_slice %259 {offsets = [0, 0], sizes = [1, 128], strides = [1, 1]} : vector<1x256xf32> to vector<1x128xf32>
    %261 = vector.extract_strided_slice %259 {offsets = [0, 128], sizes = [1, 128], strides = [1, 1]} : vector<1x256xf32> to vector<1x128xf32>
    %262 = vector.extract_strided_slice %250 {offsets = [0, 256], sizes = [1, 128], strides = [1, 1]} : vector<1x384xf32> to vector<1x128xf32>
    %263 = vector.extract_strided_slice %251 {offsets = [0, 256], sizes = [1, 128], strides = [1, 1]} : vector<1x384xf32> to vector<1x128xf32>
    %264 = arith.addf %263, %57 : vector<1x128xf32>
    %265 = arith.mulf %260, %264 : vector<1x128xf32>
    %266 = arith.addf %262, %265 : vector<1x128xf32>
    %267 = math.tanh %266 : vector<1x128xf32>
    %cst_91 = arith.constant 1.000000e+00 : f32
    %268 = vector.broadcast %cst_91 : f32 to vector<1x128xf32>
    %269 = arith.subf %268, %261 : vector<1x128xf32>
    %270 = arith.mulf %269, %267 : vector<1x128xf32>
    %271 = arith.mulf %261, %245 : vector<1x128xf32>
    %272 = arith.addf %270, %271 : vector<1x128xf32>
    %273 = arith.index_cast %c7_i32 : i32 to index
    %c0_92 = arith.constant 0 : index
    %274 = vector.load %arg8[%273, %c0_92] : memref<8x128xf32, #tpu.memory_space<vmem>>, vector<1x128xf32>
    tpu.vector_store %arg8[%273, %c0_92], %272 {strides = array<i32>} : memref<8x128xf32, #tpu.memory_space<vmem>>, vector<1x128xf32>,
    %275 = arith.truncf %272 : vector<1x128xf32> to vector<1x128xbf16>
    %c8_i32 = arith.constant 8 : i32
    return
  }
  func.func @transform_0(%arg0: i32, %arg1: memref<8xi32, #tpu.memory_space<smem>>) -> (i32, i32) {
    %c0_i32 = arith.constant 0 : i32
    %c0_i32_0 = arith.constant 0 : i32
    %c0_i32_1 = arith.constant 0 : i32
    return %c0_i32, %c0_i32_0 : i32, i32
  }
  func.func @transform_1(%arg0: i32, %arg1: memref<8xi32, #tpu.memory_space<smem>>) -> (i32, i32) {
    %c0_i32 = arith.constant 0 : i32
    %c0_i32_0 = arith.constant 0 : i32
    %c0_i32_1 = arith.constant 0 : i32
    return %c0_i32, %c0_i32_0 : i32, i32
  }
  func.func @transform_2(%arg0: i32, %arg1: memref<8xi32, #tpu.memory_space<smem>>) -> (i32, i32) {
    %c0_i32 = arith.constant 0 : i32
    %c0_i32_0 = arith.constant 0 : i32
    %c0_i32_1 = arith.constant 0 : i32
    return %c0_i32, %c0_i32_0 : i32, i32
  }
  func.func @transform_3(%arg0: i32, %arg1: memref<8xi32, #tpu.memory_space<smem>>) -> (i32, i32) {
    %c0_i32 = arith.constant 0 : i32
    %c0_i32_0 = arith.constant 0 : i32
    %c0_i32_1 = arith.constant 0 : i32
    return %c0_i32, %c0_i32_0 : i32, i32
  }
  func.func @transform_4(%arg0: i32, %arg1: memref<8xi32, #tpu.memory_space<smem>>) -> (i32, i32) {
    %c0_i32 = arith.constant 0 : i32
    %c0_i32_0 = arith.constant 0 : i32
    %c0_i32_1 = arith.constant 0 : i32
    return %c0_i32, %c0_i32_0 : i32, i32
  }
  func.func @transform_5(%arg0: i32, %arg1: memref<8xi32, #tpu.memory_space<smem>>) -> (i32, i32) {
    %c0_i32 = arith.constant 0 : i32
    %c0_i32_0 = arith.constant 0 : i32
    %c0_i32_1 = arith.constant 0 : i32
    return %c0_i32, %c0_i32_0 : i32, i32
  }
  func.func @transform_6(%arg0: i32, %arg1: memref<8xi32, #tpu.memory_space<smem>>) -> (i32, i32) {
    %c0_i32 = arith.constant 0 : i32
    %c0_i32_0 = arith.constant 0 : i32
    %c0_i32_1 = arith.constant 0 : i32
    return %c0_i32, %c0_i32_0 : i32, i32
  }
}

</mosaic_0001>

<llo_original>
// kernel: tpu_custom_call.1
$region0: #{tpu_custom_call.1}
  #allocation0 [shape = 'u32[]', space=smem, size = 0x4, offset = 0x4, fixed_abs, tag = 'smem constant byte address 0x4 - core index']
  #allocation1 [shape = 'u32[72,128]{1,0:T(1,128)}', space=vmem, size = 0x9000, scoped, tag = 'internal scratch']
  #allocation2 [shape = 'f32[8,128]{1,0:T(8,128)}', space=vmem, size = 0x1000, scoped, tag = 'scratch operand']
  #allocation3 [shape = 'f32[8,384]{1,0:T(8,128)}', space=vmem, size = 0x3000, scoped, tag = 'scratch operand']
  #allocation4 [shape = 's32[1]{0}', space=sflag, size = 0x4, scoped, tag = 'scoped memory for tpu_custom_call.1']
  #allocation5 [shape = 'u8[512]{0}', space=smem, size = 0x200, scoped, tag = 'prefetched SMEM operand 0']
  %s0 = inlined_call_operand.hbm [shape: s32[8], index: 0, kind: input, shape index: {}]
  %s1 = inlined_call_operand.hbm [shape: f32[64,128], index: 1, kind: input, shape index: {}]
  %s2 = inlined_call_operand.vmem [shape: f32[1,128], index: 2, kind: input, shape index: {}]
  %s3 = inlined_call_operand.hbm [shape: bf16[128,384], index: 3, kind: input, shape index: {}]
  %s4 = inlined_call_operand.hbm [shape: bf16[128,384], index: 4, kind: input, shape index: {}]
  %s5 = inlined_call_operand.vmem [shape: f32[1,384], index: 5, kind: input, shape index: {}]
  %s6 = inlined_call_operand.vmem [shape: f32[1,128], index: 6, kind: input, shape index: {}]
  %s7 = inlined_call_operand.hbm [shape: f32[8,128], index: 7, kind: output, shape index: {}]
  %s8 = sld [smem:[#allocation0]]
  $region46: #{tpu_custom_call.1} parent=0
    _
  %s10 = ssub.s32 1, %s8
  %s11 = scalar_select 0, %s10, %s8
  %s13 = sshll.u32 %s0, 4
  %s14 = int_to_ptr.hbm [resolvable:$true] %s13
  %16 = dma.hbm_to_smem %s14, 16, [#allocation5], [#allocation4]
  %18 = dma.done [#allocation4], 16
  %19 = sfence
  $region1: #{tpu_custom_call.1} parent=0
    #allocation6 [shape = 'u8[32768]{0}', space=vmem, size = 0x8000, scoped, tag = 'input window, operand 1, single buffered']
    #allocation7 [shape = 's32[1]{0}', space=sflag, size = 0x4, scoped, tag = 'scoped memory for tpu_custom_call.1']
    #allocation8 [shape = 's32[1]{0}', space=sflag, size = 0x4, scoped, tag = 'scoped memory for tpu_custom_call.1']
    #allocation9 [shape = 'u8[98304]{0}', space=vmem, size = 0x18000, scoped, tag = 'input window, operand 3, single buffered']
    #allocation10 [shape = 's32[1]{0}', space=sflag, size = 0x4, scoped, tag = 'scoped memory for tpu_custom_call.1']
    #allocation11 [shape = 'u8[98304]{0}', space=vmem, size = 0x18000, scoped, tag = 'input window, operand 4, single buffered']
    #allocation12 [shape = 'u8[4096]{0}', space=vmem, size = 0x1000, scoped, tag = 'output window, operand 0, single buffered']
    %20 = vsyncpa [#allocation7], 0
    %21 = vsyncpa [#allocation10], 0
    %22 = vsyncpa [#allocation8], 0
    // Predicated region
    $region2: #{tpu_custom_call.1} parent=1 // pred_check
      _
    $region3: #{tpu_custom_call.1} parent=1 // pred_check_branch
      %24 = sbr.rel (0) target = $region5
    $region4: #{tpu_custom_call.1} parent=1 // pred_region
      %26 = vsyncadd [#allocation7], 0
      %s27 = sshll.u32 %s1, 4
      %s28 = int_to_ptr.hbm [resolvable:$true] %s27
      %s29 = sshll.u32 [#allocation6], 4
      %s30 = int_to_ptr.vmem [resolvable:$true] %s29
      %35 = dma.hbm_to_vmem [thread:$0]  %s28, 1024, %s30, [#allocation7], 128, 128, 8
    $region5: #{tpu_custom_call.1} parent=1 // pred_fallthru
      _
    // Predicated region
    $region6: #{tpu_custom_call.1} parent=1 // pred_check
      _
    $region7: #{tpu_custom_call.1} parent=1 // pred_check_branch
      %37 = sbr.rel (0) target = $region9
    $region8: #{tpu_custom_call.1} parent=1 // pred_region
      _
    $region9: #{tpu_custom_call.1} parent=1 // pred_fallthru
      _
    // Predicated region
    $region10: #{tpu_custom_call.1} parent=1 // pred_check
      _
    $region11: #{tpu_custom_call.1} parent=1 // pred_check_branch
      %39 = sbr.rel (0) target = $region13
    $region12: #{tpu_custom_call.1} parent=1 // pred_region
      %41 = vsyncadd [#allocation10], 0
      %s42 = sshll.u32 %s3, 4
      %s43 = int_to_ptr.hbm [resolvable:$true] %s42
      %s44 = sshll.u32 [#allocation9], 4
      %s45 = int_to_ptr.vmem [resolvable:$true] %s44
      %50 = dma.hbm_to_vmem [thread:$0]  %s43, 3072, %s45, [#allocation10], 192, 192, 12
    $region13: #{tpu_custom_call.1} parent=1 // pred_fallthru
      _
    // Predicated region
    $region14: #{tpu_custom_call.1} parent=1 // pred_check
      _
    $region15: #{tpu_custom_call.1} parent=1 // pred_check_branch
      %52 = sbr.rel (0) target = $region17
    $region16: #{tpu_custom_call.1} parent=1 // pred_region
      %54 = vsyncadd [#allocation10], 0
      %s55 = sshll.u32 %s4, 4
      %s56 = int_to_ptr.hbm [resolvable:$true] %s55
      %s57 = sshll.u32 [#allocation11], 4
      %s58 = int_to_ptr.vmem [resolvable:$true] %s57
      %63 = dma.hbm_to_vmem [thread:$0]  %s56, 3072, %s58, [#allocation10], 192, 192, 12
    $region17: #{tpu_custom_call.1} parent=1 // pred_fallthru
      _
    // Predicated region
    $region18: #{tpu_custom_call.1} parent=1 // pred_check
      _
    $region19: #{tpu_custom_call.1} parent=1 // pred_check_branch
      %65 = sbr.rel (0) target = $region21
    $region20: #{tpu_custom_call.1} parent=1 // pred_region
      _
    $region21: #{tpu_custom_call.1} parent=1 // pred_fallthru
      _
    // Predicated region
    $region22: #{tpu_custom_call.1} parent=1 // pred_check
      _
    $region23: #{tpu_custom_call.1} parent=1 // pred_check_branch
      %67 = sbr.rel (0) target = $region25
    $region24: #{tpu_custom_call.1} parent=1 // pred_region
      _
    $region25: #{tpu_custom_call.1} parent=1 // pred_fallthru
      _
    // Predicated region
    $region26: #{tpu_custom_call.1} parent=1 // pred_check
      _
    $region27: #{tpu_custom_call.1} parent=1 // pred_check_branch
      %69 = sbr.rel (0) target = $region29
    $region28: #{tpu_custom_call.1} parent=1 // pred_region
      %71 = dma.done [#allocation7], 1024
    $region29: #{tpu_custom_call.1} parent=1 // pred_fallthru
      _
    // Predicated region
    $region30: #{tpu_custom_call.1} parent=1 // pred_check
      _
    $region31: #{tpu_custom_call.1} parent=1 // pred_check_branch
      %73 = sbr.rel (0) target = $region33
    $region32: #{tpu_custom_call.1} parent=1 // pred_region
      %75 = dma.done [#allocation10], 3072
    $region33: #{tpu_custom_call.1} parent=1 // pred_fallthru
      _
    // Predicated region
    $region34: #{tpu_custom_call.1} parent=1 // pred_check
      _
    $region35: #{tpu_custom_call.1} parent=1 // pred_check_branch
      %77 = sbr.rel (0) target = $region37
    $region36: #{tpu_custom_call.1} parent=1 // pred_region
      %79 = dma.done [#allocation10], 3072
    $region37: #{tpu_custom_call.1} parent=1 // pred_fallthru
      _
    %s80 = sld [smem:[#allocation5]]
    %p81 = scmp.gt.s32.totalorder %s80, 0
    %s82 = scalar_select %p81, %s80, 0
    %p83 = scmp.lt.s32.totalorder %s82, 63
    %s84 = scalar_select %p83, %s82, 63
    %s85 = scalar_lea.vmem [#allocation6], %s84
    %v86 = vld [vmem:[%s85] sm:$0x1]
    %87 = vst [vmem:[#allocation2] sm:$0x1] %v86
    %s88 = sld [smem:[#allocation5 + $0x1]]
    %p89 = scmp.gt.s32.totalorder %s88, 0
    %s90 = scalar_select %p89, %s88, 0
    %p91 = scmp.lt.s32.totalorder %s90, 63
    %s92 = scalar_select %p91, %s90, 63
    %s93 = scalar_lea.vmem [#allocation6], %s92
    %v94 = vld [vmem:[%s93] sm:$0x1]
    %95 = vst [vmem:[#allocation2 + $0x1] sm:$0x1] %v94
    %s96 = sld [smem:[#allocation5 + $0x2]]
    %p97 = scmp.gt.s32.totalorder %s96, 0
    %s98 = scalar_select %p97, %s96, 0
    %p99 = scmp.lt.s32.totalorder %s98, 63
    %s100 = scalar_select %p99, %s98, 63
    %s101 = scalar_lea.vmem [#allocation6], %s100
    %v102 = vld [vmem:[%s101] sm:$0x1]
    %103 = vst [vmem:[#allocation2 + $0x2] sm:$0x1] %v102
    %s104 = sld [smem:[#allocation5 + $0x3]]
    %p105 = scmp.gt.s32.totalorder %s104, 0
    %s106 = scalar_select %p105, %s104, 0
    %p107 = scmp.lt.s32.totalorder %s106, 63
    %s108 = scalar_select %p107, %s106, 63
    %s109 = scalar_lea.vmem [#allocation6], %s108
    %v110 = vld [vmem:[%s109] sm:$0x1]
    %111 = vst [vmem:[#allocation2 + $0x3] sm:$0x1] %v110
    %s112 = sld [smem:[#allocation5 + $0x4]]
    %p113 = scmp.gt.s32.totalorder %s112, 0
    %s114 = scalar_select %p113, %s112, 0
    %p115 = scmp.lt.s32.totalorder %s114, 63
    %s116 = scalar_select %p115, %s114, 63
    %s117 = scalar_lea.vmem [#allocation6], %s116
    %v118 = vld [vmem:[%s117] sm:$0x1]
    %119 = vst [vmem:[#allocation2 + $0x4] sm:$0x1] %v118
    %s120 = sld [smem:[#allocation5 + $0x5]]
    %p121 = scmp.gt.s32.totalorder %s120, 0
    %s122 = scalar_select %p121, %s120, 0
    %p123 = scmp.lt.s32.totalorder %s122, 63
    %s124 = scalar_select %p123, %s122, 63
    %s125 = scalar_lea.vmem [#allocation6], %s124
    %v126 = vld [vmem:[%s125] sm:$0x1]
    %127 = vst [vmem:[#allocation2 + $0x5] sm:$0x1] %v126
    %s128 = sld [smem:[#allocation5 + $0x6]]
    %p129 = scmp.gt.s32.totalorder %s128, 0
    %s130 = scalar_select %p129, %s128, 0
    %p131 = scmp.lt.s32.totalorder %s130, 63
    %s132 = scalar_select %p131, %s130, 63
    %s133 = scalar_lea.vmem [#allocation6], %s132
    %v134 = vld [vmem:[%s133] sm:$0x1]
    %135 = vst [vmem:[#allocation2 + $0x6] sm:$0x1] %v134
    %s136 = sld [smem:[#allocation5 + $0x7]]
    %p137 = scmp.gt.s32.totalorder %s136, 0
    %s138 = scalar_select %p137, %s136, 0
    %p139 = scmp.lt.s32.totalorder %s138, 63
    %s140 = scalar_select %p139, %s138, 63
    %s141 = scalar_lea.vmem [#allocation6], %s140
    %v142 = vld [vmem:[%s141] sm:$0x1]
    %143 = vst [vmem:[#allocation2 + $0x7] sm:$0x1] %v142
    %v144 = vld [vmem:[#allocation2] sm:$0xff]
    %v145 = vpack.c.bf16 %v144, %v144
    %v146 = vld [vmem:[#allocation9] sm:$0xff]
    %v147 = vld [vmem:[#allocation9 + $0x8] sm:$0xf]
    %v148 = vld [vmem:[#allocation9 + $0xc] sm:$0xff]
    %v149 = vld [vmem:[#allocation9 + $0x14] sm:$0xf]
    %v150 = vld [vmem:[#allocation9 + $0x18] sm:$0xff]
    %v151 = vld [vmem:[#allocation9 + $0x20] sm:$0xf]
    %v152 = vld [vmem:[#allocation9 + $0x24] sm:$0xff]
    %v153 = vld [vmem:[#allocation9 + $0x2c] sm:$0xf]
    %v154 = vld [vmem:[#allocation9 + $0x30] sm:$0xff]
    %v155 = vld [vmem:[#allocation9 + $0x38] sm:$0xf]
    %v156 = vld [vmem:[#allocation9 + $0x3c] sm:$0xff]
    %v157 = vld [vmem:[#allocation9 + $0x44] sm:$0xf]
    %v158 = vld [vmem:[#allocation9 + $0x48] sm:$0xff]
    %v159 = vld [vmem:[#allocation9 + $0x50] sm:$0xf]
    %v160 = vld [vmem:[#allocation9 + $0x54] sm:$0xff]
    %v161 = vld [vmem:[#allocation9 + $0x5c] sm:$0xf]
    %v162 = vld [vmem:[#allocation9 + $0x60] sm:$0xff]
    %v163 = vld [vmem:[#allocation9 + $0x68] sm:$0xf]
    %v164 = vld [vmem:[#allocation9 + $0x6c] sm:$0xff]
    %v165 = vld [vmem:[#allocation9 + $0x74] sm:$0xf]
    %v166 = vld [vmem:[#allocation9 + $0x78] sm:$0xff]
    %v167 = vld [vmem:[#allocation9 + $0x80] sm:$0xf]
    %v168 = vld [vmem:[#allocation9 + $0x84] sm:$0xff]
    %v169 = vld [vmem:[#allocation9 + $0x8c] sm:$0xf]
    %v170 = vld [vmem:[#allocation9 + $0x90] sm:$0xff]
    %v171 = vld [vmem:[#allocation9 + $0x98] sm:$0xf]
    %v172 = vld [vmem:[#allocation9 + $0x9c] sm:$0xff]
    %v173 = vld [vmem:[#allocation9 + $0xa4] sm:$0xf]
    %v174 = vld [vmem:[#allocation9 + $0xa8] sm:$0xff]
    %v175 = vld [vmem:[#allocation9 + $0xb0] sm:$0xf]
    %v176 = vld [vmem:[#allocation9 + $0xb4] sm:$0xff]
    %v177 = vld [vmem:[#allocation9 + $0xbc] sm:$0xf]
    %v178 = vld [vmem:[%s5] sm:$0x7]
    %v180 = vperm.slane %v178, 0
    %v181 = vperm.slane %v178, 1
    %v182 = vperm.slane %v178, 2
    %v218 = vunpack.c.l.b16 %v146
    %v219 = vunpack.c.h.b16 %v146
    %v220 = vunpack.c.l.b16 %v147
    %v221 = vunpack.c.l.b16 %v148
    %v222 = vunpack.c.h.b16 %v148
    %v223 = vunpack.c.l.b16 %v149
    %v224 = vunpack.c.l.b16 %v150
    %v225 = vunpack.c.h.b16 %v150
    %v226 = vunpack.c.l.b16 %v151
    %v227 = vunpack.c.l.b16 %v152
    %v228 = vunpack.c.h.b16 %v152
    %v229 = vunpack.c.l.b16 %v153
    %v230 = vunpack.c.l.b16 %v154
    %v231 = vunpack.c.h.b16 %v154
    %v232 = vunpack.c.l.b16 %v155
    %v233 = vunpack.c.l.b16 %v156
    %v234 = vunpack.c.h.b16 %v156
    %v235 = vunpack.c.l.b16 %v157
    %v236 = vunpack.c.l.b16 %v158
    %v237 = vunpack.c.h.b16 %v158
    %v238 = vunpack.c.l.b16 %v159
    %v239 = vunpack.c.l.b16 %v160
    %v240 = vunpack.c.h.b16 %v160
    %v241 = vunpack.c.l.b16 %v161
    %v242 = vunpack.c.l.b16 %v162
    %v243 = vunpack.c.h.b16 %v162
    %v244 = vunpack.c.l.b16 %v163
    %v245 = vunpack.c.l.b16 %v164
    %v246 = vunpack.c.h.b16 %v164
    %v247 = vunpack.c.l.b16 %v165
    %v248 = vunpack.c.l.b16 %v166
    %v249 = vunpack.c.h.b16 %v166
    %v250 = vunpack.c.l.b16 %v167
    %v251 = vunpack.c.l.b16 %v168
    %v252 = vunpack.c.h.b16 %v168
    %v253 = vunpack.c.l.b16 %v169
    %v254 = vunpack.c.l.b16 %v170
    %v255 = vunpack.c.h.b16 %v170
    %v256 = vunpack.c.l.b16 %v171
    %v257 = vunpack.c.l.b16 %v172
    %v258 = vunpack.c.h.b16 %v172
    %v259 = vunpack.c.l.b16 %v173
    %v260 = vunpack.c.l.b16 %v174
    %v261 = vunpack.c.h.b16 %v174
    %v262 = vunpack.c.l.b16 %v175
    %v263 = vunpack.c.l.b16 %v176
    %v264 = vunpack.c.h.b16 %v176
    %v265 = vunpack.c.l.b16 %v177
    %v266 = vpack.c.b16 %v221, %v218
    %v267 = vpack.c.b16 %v222, %v219
    %v268 = vpack.c.b16 %v223, %v220
    %v269 = vpack.c.b16 %v227, %v224
    %v270 = vpack.c.b16 %v228, %v225
    %v271 = vpack.c.b16 %v229, %v226
    %v272 = vpack.c.b16 %v233, %v230
    %v273 = vpack.c.b16 %v234, %v231
    %v274 = vpack.c.b16 %v235, %v232
    %v275 = vpack.c.b16 %v239, %v236
    %v276 = vpack.c.b16 %v240, %v237
    %v277 = vpack.c.b16 %v241, %v238
    %v278 = vpack.c.b16 %v245, %v242
    %v279 = vpack.c.b16 %v246, %v243
    %v280 = vpack.c.b16 %v247, %v244
    %v281 = vpack.c.b16 %v251, %v248
    %v282 = vpack.c.b16 %v252, %v249
    %v283 = vpack.c.b16 %v253, %v250
    %v284 = vpack.c.b16 %v257, %v254
    %v285 = vpack.c.b16 %v258, %v255
    %v286 = vpack.c.b16 %v259, %v256
    %v287 = vpack.c.b16 %v263, %v260
    %v288 = vpack.c.b16 %v264, %v261
    %v289 = vpack.c.b16 %v265, %v262
    %314 = vmatpush.bf16.msra.mxu0 %v287
    %315 = vmatpush.bf16.msra.mxu0 %v284
    %316 = vmatpush.bf16.msra.mxu0 %v281
    %317 = vmatpush.bf16.msra.mxu0 %v278
    %318 = vmatpush.bf16.msra.mxu0 %v275
    %319 = vmatpush.bf16.msra.mxu0 %v272
    %320 = vmatpush.bf16.msra.mxu0 %v269
    %321 = vmatpush.bf16.msra.mxu0 %v266
    %322 = vmatmul.bf16.gmra.mxu0 %v145
    %v323 = vpop.f32.mrf.mxu0
    %v324 = vadd.f32 %v180, %v323
    %v325 = vpop.f32.mrf.mxu0
    %326 = vdwg.mxu0
    %327 = vmatpush.bf16.msra.mxu0 %v288
    %328 = vmatpush.bf16.msra.mxu0 %v285
    %329 = vmatpush.bf16.msra.mxu0 %v282
    %330 = vmatpush.bf16.msra.mxu0 %v279
    %331 = vmatpush.bf16.msra.mxu0 %v276
    %332 = vmatpush.bf16.msra.mxu0 %v273
    %333 = vmatpush.bf16.msra.mxu0 %v270
    %334 = vmatpush.bf16.msra.mxu0 %v267
    %335 = vmatmul.bf16.gmra.mxu0 %v145
    %v336 = vpop.f32.mrf.mxu0
    %v337 = vadd.f32 %v181, %v336
    %v338 = vpop.f32.mrf.mxu0
    %339 = vdwg.mxu0
    %340 = vmatpush.bf16.msra.mxu0 %v289
    %341 = vmatpush.bf16.msra.mxu0 %v286
    %342 = vmatpush.bf16.msra.mxu0 %v283
    %343 = vmatpush.bf16.msra.mxu0 %v280
    %344 = vmatpush.bf16.msra.mxu0 %v277
    %345 = vmatpush.bf16.msra.mxu0 %v274
    %346 = vmatpush.bf16.msra.mxu0 %v271
    %347 = vmatpush.bf16.msra.mxu0 %v268
    %348 = vmatmul.bf16.gmra.mxu0 %v145
    %v349 = vpop.f32.mrf.mxu0
    %v350 = vadd.f32 %v182, %v349
    %v351 = vpop.f32.mrf.mxu0
    %352 = vdwg.mxu0
    %353 = vst [vmem:[#allocation3] sm:$0xff] %v324
    %354 = vst [vmem:[#allocation3 + $0x8] sm:$0xff] %v337
    %355 = vst [vmem:[#allocation3 + $0x10] sm:$0xff] %v350
    %v356 = vld [vmem:[#allocation11] sm:$0xff]
    %v357 = vld [vmem:[#allocation11 + $0x8] sm:$0xf]
    %v358 = vld [vmem:[#allocation11 + $0xc] sm:$0xff]
    %v359 = vld [vmem:[#allocation11 + $0x14] sm:$0xf]
    %v360 = vld [vmem:[#allocation11 + $0x18] sm:$0xff]
    %v361 = vld [vmem:[#allocation11 + $0x20] sm:$0xf]
    %v362 = vld [vmem:[#allocation11 + $0x24] sm:$0xff]
    %v363 = vld [vmem:[#allocation11 + $0x2c] sm:$0xf]
    %v364 = vld [vmem:[#allocation11 + $0x30] sm:$0xff]
    %v365 = vld [vmem:[#allocation11 + $0x38] sm:$0xf]
    %v366 = vld [vmem:[#allocation11 + $0x3c] sm:$0xff]
    %v367 = vld [vmem:[#allocation11 + $0x44] sm:$0xf]
    %v368 = vld [vmem:[#allocation11 + $0x48] sm:$0xff]
    %v369 = vld [vmem:[#allocation11 + $0x50] sm:$0xf]
    %v370 = vld [vmem:[#allocation11 + $0x54] sm:$0xff]
    %v371 = vld [vmem:[#allocation11 + $0x5c] sm:$0xf]
    %v372 = vld [vmem:[#allocation11 + $0x60] sm:$0xff]
    %v373 = vld [vmem:[#allocation11 + $0x68] sm:$0xf]
    %v374 = vld [vmem:[#allocation11 + $0x6c] sm:$0xff]
    %v375 = vld [vmem:[#allocation11 + $0x74] sm:$0xf]
    %v376 = vld [vmem:[#allocation11 + $0x78] sm:$0xff]
    %v377 = vld [vmem:[#allocation11 + $0x80] sm:$0xf]
    %v378 = vld [vmem:[#allocation11 + $0x84] sm:$0xff]
    %v379 = vld [vmem:[#allocation11 + $0x8c] sm:$0xf]
    %v380 = vld [vmem:[#allocation11 + $0x90] sm:$0xff]
    %v381 = vld [vmem:[#allocation11 + $0x98] sm:$0xf]
    %v382 = vld [vmem:[#allocation11 + $0x9c] sm:$0xff]
    %v383 = vld [vmem:[#allocation11 + $0xa4] sm:$0xf]
    %v384 = vld [vmem:[#allocation11 + $0xa8] sm:$0xff]
    %v385 = vld [vmem:[#allocation11 + $0xb0] sm:$0xf]
    %v386 = vld [vmem:[#allocation11 + $0xb4] sm:$0xff]
    %v387 = vld [vmem:[#allocation11 + $0xbc] sm:$0xf]
    %v388 = vld [vmem:[%s6] sm:$0x1]
    %v389 = vld [vmem:[%s2] sm:$0x1]
    %v390 = vpack.c.bf16 %v389, %v389
    %v391 = vld [vmem:[#allocation3] ss:$8 sm:$0x7]
    %v424 = vunpack.c.l.b16 %v356
    %v425 = vunpack.c.h.b16 %v356
    %v426 = vunpack.c.l.b16 %v357
    %v427 = vunpack.c.l.b16 %v358
    %v428 = vunpack.c.h.b16 %v358
    %v429 = vunpack.c.l.b16 %v359
    %v430 = vunpack.c.l.b16 %v360
    %v431 = vunpack.c.h.b16 %v360
    %v432 = vunpack.c.l.b16 %v361
    %v433 = vunpack.c.l.b16 %v362
    %v434 = vunpack.c.h.b16 %v362
    %v435 = vunpack.c.l.b16 %v363
    %v436 = vunpack.c.l.b16 %v364
    %v437 = vunpack.c.h.b16 %v364
    %v438 = vunpack.c.l.b16 %v365
    %v439 = vunpack.c.l.b16 %v366
    %v440 = vunpack.c.h.b16 %v366
    %v441 = vunpack.c.l.b16 %v367
    %v442 = vunpack.c.l.b16 %v368
    %v443 = vunpack.c.h.b16 %v368
    %v444 = vunpack.c.l.b16 %v369
    %v445 = vunpack.c.l.b16 %v370
    %v446 = vunpack.c.h.b16 %v370
    %v447 = vunpack.c.l.b16 %v371
    %v448 = vunpack.c.l.b16 %v372
    %v449 = vunpack.c.h.b16 %v372
    %v450 = vunpack.c.l.b16 %v373
    %v451 = vunpack.c.l.b16 %v374
    %v452 = vunpack.c.h.b16 %v374
    %v453 = vunpack.c.l.b16 %v375
    %v454 = vunpack.c.l.b16 %v376
    %v455 = vunpack.c.h.b16 %v376
    %v456 = vunpack.c.l.b16 %v377
    %v457 = vunpack.c.l.b16 %v378
    %v458 = vunpack.c.h.b16 %v378
    %v459 = vunpack.c.l.b16 %v379
    %v460 = vunpack.c.l.b16 %v380
    %v461 = vunpack.c.h.b16 %v380
    %v462 = vunpack.c.l.b16 %v381
    %v463 = vunpack.c.l.b16 %v382
    %v464 = vunpack.c.h.b16 %v382
    %v465 = vunpack.c.l.b16 %v383
    %v466 = vunpack.c.l.b16 %v384
    %v467 = vunpack.c.h.b16 %v384
    %v468 = vunpack.c.l.b16 %v385
    %v469 = vunpack.c.l.b16 %v386
    %v470 = vunpack.c.h.b16 %v386
    %v471 = vunpack.c.l.b16 %v387
    %v472 = vpack.c.b16 %v427, %v424
    %v473 = vpack.c.b16 %v428, %v425
    %v474 = vpack.c.b16 %v429, %v426
    %v475 = vpack.c.b16 %v433, %v430
    %v476 = vpack.c.b16 %v434, %v431
    %v477 = vpack.c.b16 %v435, %v432
    %v478 = vpack.c.b16 %v439, %v436
    %v479 = vpack.c.b16 %v440, %v437
    %v480 = vpack.c.b16 %v441, %v438
    %v481 = vpack.c.b16 %v445, %v442
    %v482 = vpack.c.b16 %v446, %v443
    %v483 = vpack.c.b16 %v447, %v444
    %v484 = vpack.c.b16 %v451, %v448
    %v485 = vpack.c.b16 %v452, %v449
    %v486 = vpack.c.b16 %v453, %v450
    %v487 = vpack.c.b16 %v457, %v454
    %v488 = vpack.c.b16 %v458, %v455
    %v489 = vpack.c.b16 %v459, %v456
    %v490 = vpack.c.b16 %v463, %v460
    %v491 = vpack.c.b16 %v464, %v461
    %v492 = vpack.c.b16 %v465, %v462
    %v493 = vpack.c.b16 %v469, %v466
    %v494 = vpack.c.b16 %v470, %v467
    %v495 = vpack.c.b16 %v471, %v468
    %520 = vmatpush.bf16.msra.mxu0 %v493
    %521 = vmatpush.bf16.msra.mxu0 %v490
    %522 = vmatpush.bf16.msra.mxu0 %v487
    %523 = vmatpush.bf16.msra.mxu0 %v484
    %524 = vmatpush.bf16.msra.mxu0 %v481
    %525 = vmatpush.bf16.msra.mxu0 %v478
    %526 = vmatpush.bf16.msra.mxu0 %v475
    %527 = vmatpush.bf16.msra.mxu0 %v472
    %528 = vmatmul.bf16.gmra.mxu0 %v390
    %v529 = vpop.f32.mrf.mxu0
    %v530 = vadd.f32 0.0, %v529
    %v531 = vpop.f32.mrf.mxu0
    %532 = vdwg.mxu0
    %533 = vmatpush.bf16.msra.mxu0 %v494
    %534 = vmatpush.bf16.msra.mxu0 %v491
    %535 = vmatpush.bf16.msra.mxu0 %v488
    %536 = vmatpush.bf16.msra.mxu0 %v485
    %537 = vmatpush.bf16.msra.mxu0 %v482
    %538 = vmatpush.bf16.msra.mxu0 %v479
    %539 = vmatpush.bf16.msra.mxu0 %v476
    %540 = vmatpush.bf16.msra.mxu0 %v473
    %541 = vmatmul.bf16.gmra.mxu0 %v390
    %v542 = vpop.f32.mrf.mxu0
    %v543 = vadd.f32 0.0, %v542
    %v544 = vpop.f32.mrf.mxu0
    %545 = vdwg.mxu0
    %546 = vmatpush.bf16.msra.mxu0 %v495
    %547 = vmatpush.bf16.msra.mxu0 %v492
    %548 = vmatpush.bf16.msra.mxu0 %v489
    %549 = vmatpush.bf16.msra.mxu0 %v486
    %550 = vmatpush.bf16.msra.mxu0 %v483
    %551 = vmatpush.bf16.msra.mxu0 %v480
    %552 = vmatpush.bf16.msra.mxu0 %v477
    %553 = vmatpush.bf16.msra.mxu0 %v474
    %554 = vmatmul.bf16.gmra.mxu0 %v390
    %v555 = vpop.f32.mrf.mxu0
    %v556 = vadd.f32 0.0, %v555
    %v557 = vpop.f32.mrf.mxu0
    %558 = vdwg.mxu0
    %v561 = vrot.slane %v543, 7
    %vm562 = vcmask 1040384
    %v563 = vsel %vm562, %v530, %v561
    %v565 = vadd.f32 %v391, %v563
    %v566 = vxor.u32 %v565, 2147483648
    %v567 = vmul.f32 %v566, 1.442695
    %v568 = vpow.pop %v567
    %v569 = vadd.f32 %v568, 1.0
    %v570 = vrcp.pop %v569
    %v571 = vmul.f32 %v569, %v570
    %v572 = vsub.f32 1.0, %v571
    %v573 = vmul.f32 %v570, %v572
    %v574 = vadd.f32 %v570, %v573
    %vm575 = vweird.f32 %v569
    %vm576 = vweird.f32 %v570
    %vm577 = vmor %vm575, %vm576
    %v578 = vsel %vm577, %v570, %v574
    %v579 = vand.u32 2147483647, %v569
    %vm580 = vcmp.eq.f32.partialorder %v579, 8.507059e+37
    %v581 = vand.u32 %v569, 2147483648
    %v582 = vor.u32 1.1754944e-38, %v581
    %v583 = vsel %vm580, %v582, %v578
    %v584 = vmul.f32 1.0, %v583
    %v585 = vadd.f32 %v556, %v388
    %v586 = vmul.f32 %v584, %v585
    %v588 = vrot.slane %v391, 2
    %v590 = vadd.f32 %v588, %v586
    %v591 = vtanh.pop %v590
    %v593 = vrot.slane %v584, 1
    %v595 = vsub.f32 1.0, %v593
    %v596 = vmul.f32 %v595, %v591
    %v597 = vmul.f32 %v593, %v389
    %v598 = vadd.f32 %v596, %v597
    %599 = vst [vmem:[#allocation12] sm:$0x1] %v598
    %v600 = vpack.c.bf16 %v598, %v598
    %s601 = scalar_lea.vmem [#allocation3], 1
    %v602 = vld [vmem:[%s601] ss:$8 sm:$0x7]
    %603 = vmatpush.bf16.msra.mxu0 %v493
    %604 = vmatpush.bf16.msra.mxu0 %v490
    %605 = vmatpush.bf16.msra.mxu0 %v487
    %606 = vmatpush.bf16.msra.mxu0 %v484
    %607 = vmatpush.bf16.msra.mxu0 %v481
    %608 = vmatpush.bf16.msra.mxu0 %v478
    %609 = vmatpush.bf16.msra.mxu0 %v475
    %610 = vmatpush.bf16.msra.mxu0 %v472
    %611 = vmatmul.bf16.gmra.mxu0 %v600
    %v612 = vpop.f32.mrf.mxu0
    %v613 = vadd.f32 0.0, %v612
    %v614 = vpop.f32.mrf.mxu0
    %615 = vdwg.mxu0
    %616 = vmatpush.bf16.msra.mxu0 %v494
    %617 = vmatpush.bf16.msra.mxu0 %v491
    %618 = vmatpush.bf16.msra.mxu0 %v488
    %619 = vmatpush.bf16.msra.mxu0 %v485
    %620 = vmatpush.bf16.msra.mxu0 %v482
    %621 = vmatpush.bf16.msra.mxu0 %v479
    %622 = vmatpush.bf16.msra.mxu0 %v476
    %623 = vmatpush.bf16.msra.mxu0 %v473
    %624 = vmatmul.bf16.gmra.mxu0 %v600
    %v625 = vpop.f32.mrf.mxu0
    %v626 = vadd.f32 0.0, %v625
    %v627 = vpop.f32.mrf.mxu0
    %628 = vdwg.mxu0
    %629 = vmatpush.bf16.msra.mxu0 %v495
    %630 = vmatpush.bf16.msra.mxu0 %v492
    %631 = vmatpush.bf16.msra.mxu0 %v489
    %632 = vmatpush.bf16.msra.mxu0 %v486
    %633 = vmatpush.bf16.msra.mxu0 %v483
    %634 = vmatpush.bf16.msra.mxu0 %v480
    %635 = vmatpush.bf16.msra.mxu0 %v477
    %636 = vmatpush.bf16.msra.mxu0 %v474
    %637 = vmatmul.bf16.gmra.mxu0 %v600
    %v638 = vpop.f32.mrf.mxu0
    %v639 = vadd.f32 0.0, %v638
    %v640 = vpop.f32.mrf.mxu0
    %641 = vdwg.mxu0
    %v644 = vrot.slane %v626, 7
    %v645 = vsel %vm562, %v613, %v644
    %v647 = vadd.f32 %v602, %v645
    %v648 = vxor.u32 %v647, 2147483648
    %v649 = vmul.f32 %v648, 1.442695
    %v650 = vpow.pop %v649
    %v651 = vadd.f32 %v650, 1.0
    %v652 = vrcp.pop %v651
    %v653 = vmul.f32 %v651, %v652
    %v654 = vsub.f32 1.0, %v653
    %v655 = vmul.f32 %v652, %v654
    %v656 = vadd.f32 %v652, %v655
    %vm657 = vweird.f32 %v651
    %vm658 = vweird.f32 %v652
    %vm659 = vmor %vm657, %vm658
    %v660 = vsel %vm659, %v652, %v656
    %v661 = vand.u32 2147483647, %v651
    %vm662 = vcmp.eq.f32.partialorder %v661, 8.507059e+37
    %v663 = vand.u32 %v651, 2147483648
    %v664 = vor.u32 1.1754944e-38, %v663
    %v665 = vsel %vm662, %v664, %v660
    %v666 = vmul.f32 1.0, %v665
    %v667 = vadd.f32 %v639, %v388
    %v668 = vmul.f32 %v666, %v667
    %v670 = vrot.slane %v602, 2
    %v672 = vadd.f32 %v670, %v668
    %v673 = vtanh.pop %v672
    %v675 = vrot.slane %v666, 1
    %v677 = vsub.f32 1.0, %v675
    %v678 = vmul.f32 %v677, %v673
    %v679 = vmul.f32 %v675, %v598
    %v680 = vadd.f32 %v678, %v679
    %681 = vst [vmem:[#allocation12 + $0x1] sm:$0x1] %v680
    %v682 = vpack.c.bf16 %v680, %v680
    %s683 = scalar_lea.vmem [#allocation3], 2
    %v684 = vld [vmem:[%s683] ss:$8 sm:$0x7]
    %685 = vmatpush.bf16.msra.mxu0 %v493
    %686 = vmatpush.bf16.msra.mxu0 %v490
    %687 = vmatpush.bf16.msra.mxu0 %v487
    %688 = vmatpush.bf16.msra.mxu0 %v484
    %689 = vmatpush.bf16.msra.mxu0 %v481
    %690 = vmatpush.bf16.msra.mxu0 %v478
    %691 = vmatpush.bf16.msra.mxu0 %v475
    %692 = vmatpush.bf16.msra.mxu0 %v472
    %693 = vmatmul.bf16.gmra.mxu0 %v682
    %v694 = vpop.f32.mrf.mxu0
    %v695 = vadd.f32 0.0, %v694
    %v696 = vpop.f32.mrf.mxu0
    %697 = vdwg.mxu0
    %698 = vmatpush.bf16.msra.mxu0 %v494
    %699 = vmatpush.bf16.msra.mxu0 %v491
    %700 = vmatpush.bf16.msra.mxu0 %v488
    %701 = vmatpush.bf16.msra.mxu0 %v485
    %702 = vmatpush.bf16.msra.mxu0 %v482
    %703 = vmatpush.bf16.msra.mxu0 %v479
    %704 = vmatpush.bf16.msra.mxu0 %v476
    %705 = vmatpush.bf16.msra.mxu0 %v473
    %706 = vmatmul.bf16.gmra.mxu0 %v682
    %v707 = vpop.f32.mrf.mxu0
    %v708 = vadd.f32 0.0, %v707
    %v709 = vpop.f32.mrf.mxu0
    %710 = vdwg.mxu0
    %711 = vmatpush.bf16.msra.mxu0 %v495
    %712 = vmatpush.bf16.msra.mxu0 %v492
    %713 = vmatpush.bf16.msra.mxu0 %v489
    %714 = vmatpush.bf16.msra.mxu0 %v486
    %715 = vmatpush.bf16.msra.mxu0 %v483
    %716 = vmatpush.bf16.msra.mxu0 %v480
    %717 = vmatpush.bf16.msra.mxu0 %v477
    %718 = vmatpush.bf16.msra.mxu0 %v474
    %719 = vmatmul.bf16.gmra.mxu0 %v682
    %v720 = vpop.f32.mrf.mxu0
    %v721 = vadd.f32 0.0, %v720
    %v722 = vpop.f32.mrf.mxu0
    %723 = vdwg.mxu0
    %v726 = vrot.slane %v708, 7
    %v727 = vsel %vm562, %v695, %v726
    %v729 = vadd.f32 %v684, %v727
    %v730 = vxor.u32 %v729, 2147483648
    %v731 = vmul.f32 %v730, 1.442695
    %v732 = vpow.pop %v731
    %v733 = vadd.f32 %v732, 1.0
    %v734 = vrcp.pop %v733
    %v735 = vmul.f32 %v733, %v734
    %v736 = vsub.f32 1.0, %v735
    %v737 = vmul.f32 %v734, %v736
    %v738 = vadd.f32 %v734, %v737
    %vm739 = vweird.f32 %v733
    %vm740 = vweird.f32 %v734
    %vm741 = vmor %vm739, %vm740
    %v742 = vsel %vm741, %v734, %v738
    %v743 = vand.u32 2147483647, %v733
    %vm744 = vcmp.eq.f32.partialorder %v743, 8.507059e+37
    %v745 = vand.u32 %v733, 2147483648
    %v746 = vor.u32 1.1754944e-38, %v745
    %v747 = vsel %vm744, %v746, %v742
    %v748 = vmul.f32 1.0, %v747
    %v749 = vadd.f32 %v721, %v388
    %v750 = vmul.f32 %v748, %v749
    %v752 = vrot.slane %v684, 2
    %v754 = vadd.f32 %v752, %v750
    %v755 = vtanh.pop %v754
    %v757 = vrot.slane %v748, 1
    %v759 = vsub.f32 1.0, %v757
    %v760 = vmul.f32 %v759, %v755
    %v761 = vmul.f32 %v757, %v680
    %v762 = vadd.f32 %v760, %v761
    %763 = vst [vmem:[#allocation12 + $0x2] sm:$0x1] %v762
    %v764 = vpack.c.bf16 %v762, %v762
    %s765 = scalar_lea.vmem [#allocation3], 3
    %v766 = vld [vmem:[%s765] ss:$8 sm:$0x7]
    %767 = vmatpush.bf16.msra.mxu0 %v493
    %768 = vmatpush.bf16.msra.mxu0 %v490
    %769 = vmatpush.bf16.msra.mxu0 %v487
    %770 = vmatpush.bf16.msra.mxu0 %v484
    %771 = vmatpush.bf16.msra.mxu0 %v481
    %772 = vmatpush.bf16.msra.mxu0 %v478
    %773 = vmatpush.bf16.msra.mxu0 %v475
    %774 = vmatpush.bf16.msra.mxu0 %v472
    %775 = vmatmul.bf16.gmra.mxu0 %v764
    %v776 = vpop.f32.mrf.mxu0
    %v777 = vadd.f32 0.0, %v776
    %v778 = vpop.f32.mrf.mxu0
    %779 = vdwg.mxu0
    %780 = vmatpush.bf16.msra.mxu0 %v494
    %781 = vmatpush.bf16.msra.mxu0 %v491
    %782 = vmatpush.bf16.msra.mxu0 %v488
    %783 = vmatpush.bf16.msra.mxu0 %v485
    %784 = vmatpush.bf16.msra.mxu0 %v482
    %785 = vmatpush.bf16.msra.mxu0 %v479
    %786 = vmatpush.bf16.msra.mxu0 %v476
    %787 = vmatpush.bf16.msra.mxu0 %v473
    %788 = vmatmul.bf16.gmra.mxu0 %v764
    %v789 = vpop.f32.mrf.mxu0
    %v790 = vadd.f32 0.0, %v789
    %v791 = vpop.f32.mrf.mxu0
    %792 = vdwg.mxu0
    %793 = vmatpush.bf16.msra.mxu0 %v495
    %794 = vmatpush.bf16.msra.mxu0 %v492
    %795 = vmatpush.bf16.msra.mxu0 %v489
    %796 = vmatpush.bf16.msra.mxu0 %v486
    %797 = vmatpush.bf16.msra.mxu0 %v483
    %798 = vmatpush.bf16.msra.mxu0 %v480
    %799 = vmatpush.bf16.msra.mxu0 %v477
    %800 = vmatpush.bf16.msra.mxu0 %v474
    %801 = vmatmul.bf16.gmra.mxu0 %v764
    %v802 = vpop.f32.mrf.mxu0
    %v803 = vadd.f32 0.0, %v802
    %v804 = vpop.f32.mrf.mxu0
    %805 = vdwg.mxu0
    %v808 = vrot.slane %v790, 7
    %v809 = vsel %vm562, %v777, %v808
    %v811 = vadd.f32 %v766, %v809
    %v812 = vxor.u32 %v811, 2147483648
    %v813 = vmul.f32 %v812, 1.442695
    %v814 = vpow.pop %v813
    %v815 = vadd.f32 %v814, 1.0
    %v816 = vrcp.pop %v815
    %v817 = vmul.f32 %v815, %v816
    %v818 = vsub.f32 1.0, %v817
    %v819 = vmul.f32 %v816, %v818
    %v820 = vadd.f32 %v816, %v819
    %vm821 = vweird.f32 %v815
    %vm822 = vweird.f32 %v816
    %vm823 = vmor %vm821, %vm822
    %v824 = vsel %vm823, %v816, %v820
    %v825 = vand.u32 2147483647, %v815
    %vm826 = vcmp.eq.f32.partialorder %v825, 8.507059e+37
    %v827 = vand.u32 %v815, 2147483648
    %v828 = vor.u32 1.1754944e-38, %v827
    %v829 = vsel %vm826, %v828, %v824
    %v830 = vmul.f32 1.0, %v829
    %v831 = vadd.f32 %v803, %v388
    %v832 = vmul.f32 %v830, %v831
    %v834 = vrot.slane %v766, 2
    %v836 = vadd.f32 %v834, %v832
    %v837 = vtanh.pop %v836
    %v839 = vrot.slane %v830, 1
    %v841 = vsub.f32 1.0, %v839
    %v842 = vmul.f32 %v841, %v837
    %v843 = vmul.f32 %v839, %v762
    %v844 = vadd.f32 %v842, %v843
    %845 = vst [vmem:[#allocation12 + $0x3] sm:$0x1] %v844
    %v846 = vpack.c.bf16 %v844, %v844
    %s847 = scalar_lea.vmem [#allocation3], 4
    %v848 = vld [vmem:[%s847] ss:$8 sm:$0x7]
    %849 = vmatpush.bf16.msra.mxu0 %v493
    %850 = vmatpush.bf16.msra.mxu0 %v490
    %851 = vmatpush.bf16.msra.mxu0 %v487
    %852 = vmatpush.bf16.msra.mxu0 %v484
    %853 = vmatpush.bf16.msra.mxu0 %v481
    %854 = vmatpush.bf16.msra.mxu0 %v478
    %855 = vmatpush.bf16.msra.mxu0 %v475
    %856 = vmatpush.bf16.msra.mxu0 %v472
    %857 = vmatmul.bf16.gmra.mxu0 %v846
    %v858 = vpop.f32.mrf.mxu0
    %v859 = vadd.f32 0.0, %v858
    %v860 = vpop.f32.mrf.mxu0
    %861 = vdwg.mxu0
    %862 = vmatpush.bf16.msra.mxu0 %v494
    %863 = vmatpush.bf16.msra.mxu0 %v491
    %864 = vmatpush.bf16.msra.mxu0 %v488
    %865 = vmatpush.bf16.msra.mxu0 %v485
    %866 = vmatpush.bf16.msra.mxu0 %v482
    %867 = vmatpush.bf16.msra.mxu0 %v479
    %868 = vmatpush.bf16.msra.mxu0 %v476
    %869 = vmatpush.bf16.msra.mxu0 %v473
    %870 = vmatmul.bf16.gmra.mxu0 %v846
    %v871 = vpop.f32.mrf.mxu0
    %v872 = vadd.f32 0.0, %v871
    %v873 = vpop.f32.mrf.mxu0
    %874 = vdwg.mxu0
    %875 = vmatpush.bf16.msra.mxu0 %v495
    %876 = vmatpush.bf16.msra.mxu0 %v492
    %877 = vmatpush.bf16.msra.mxu0 %v489
    %878 = vmatpush.bf16.msra.mxu0 %v486
    %879 = vmatpush.bf16.msra.mxu0 %v483
    %880 = vmatpush.bf16.msra.mxu0 %v480
    %881 = vmatpush.bf16.msra.mxu0 %v477
    %882 = vmatpush.bf16.msra.mxu0 %v474
    %883 = vmatmul.bf16.gmra.mxu0 %v846
    %v884 = vpop.f32.mrf.mxu0
    %v885 = vadd.f32 0.0, %v884
    %v886 = vpop.f32.mrf.mxu0
    %887 = vdwg.mxu0
    %v890 = vrot.slane %v872, 7
    %v891 = vsel %vm562, %v859, %v890
    %v893 = vadd.f32 %v848, %v891
    %v894 = vxor.u32 %v893, 2147483648
    %v895 = vmul.f32 %v894, 1.442695
    %v896 = vpow.pop %v895
    %v897 = vadd.f32 %v896, 1.0
    %v898 = vrcp.pop %v897
    %v899 = vmul.f32 %v897, %v898
    %v900 = vsub.f32 1.0, %v899
    %v901 = vmul.f32 %v898, %v900
    %v902 = vadd.f32 %v898, %v901
    %vm903 = vweird.f32 %v897
    %vm904 = vweird.f32 %v898
    %vm905 = vmor %vm903, %vm904
    %v906 = vsel %vm905, %v898, %v902
    %v907 = vand.u32 2147483647, %v897
    %vm908 = vcmp.eq.f32.partialorder %v907, 8.507059e+37
    %v909 = vand.u32 %v897, 2147483648
    %v910 = vor.u32 1.1754944e-38, %v909
    %v911 = vsel %vm908, %v910, %v906
    %v912 = vmul.f32 1.0, %v911
    %v913 = vadd.f32 %v885, %v388
    %v914 = vmul.f32 %v912, %v913
    %v916 = vrot.slane %v848, 2
    %v918 = vadd.f32 %v916, %v914
    %v919 = vtanh.pop %v918
    %v921 = vrot.slane %v912, 1
    %v923 = vsub.f32 1.0, %v921
    %v924 = vmul.f32 %v923, %v919
    %v925 = vmul.f32 %v921, %v844
    %v926 = vadd.f32 %v924, %v925
    %927 = vst [vmem:[#allocation12 + $0x4] sm:$0x1] %v926
    %v928 = vpack.c.bf16 %v926, %v926
    %s929 = scalar_lea.vmem [#allocation3], 5
    %v930 = vld [vmem:[%s929] ss:$8 sm:$0x7]
    %931 = vmatpush.bf16.msra.mxu0 %v493
    %932 = vmatpush.bf16.msra.mxu0 %v490
    %933 = vmatpush.bf16.msra.mxu0 %v487
    %934 = vmatpush.bf16.msra.mxu0 %v484
    %935 = vmatpush.bf16.msra.mxu0 %v481
    %936 = vmatpush.bf16.msra.mxu0 %v478
    %937 = vmatpush.bf16.msra.mxu0 %v475
    %938 = vmatpush.bf16.msra.mxu0 %v472
    %939 = vmatmul.bf16.gmra.mxu0 %v928
    %v940 = vpop.f32.mrf.mxu0
    %v941 = vadd.f32 0.0, %v940
    %v942 = vpop.f32.mrf.mxu0
    %943 = vdwg.mxu0
    %944 = vmatpush.bf16.msra.mxu0 %v494
    %945 = vmatpush.bf16.msra.mxu0 %v491
    %946 = vmatpush.bf16.msra.mxu0 %v488
    %947 = vmatpush.bf16.msra.mxu0 %v485
    %948 = vmatpush.bf16.msra.mxu0 %v482
    %949 = vmatpush.bf16.msra.mxu0 %v479
    %950 = vmatpush.bf16.msra.mxu0 %v476
    %951 = vmatpush.bf16.msra.mxu0 %v473
    %952 = vmatmul.bf16.gmra.mxu0 %v928
    %v953 = vpop.f32.mrf.mxu0
    %v954 = vadd.f32 0.0, %v953
    %v955 = vpop.f32.mrf.mxu0
    %956 = vdwg.mxu0
    %957 = vmatpush.bf16.msra.mxu0 %v495
    %958 = vmatpush.bf16.msra.mxu0 %v492
    %959 = vmatpush.bf16.msra.mxu0 %v489
    %960 = vmatpush.bf16.msra.mxu0 %v486
    %961 = vmatpush.bf16.msra.mxu0 %v483
    %962 = vmatpush.bf16.msra.mxu0 %v480
    %963 = vmatpush.bf16.msra.mxu0 %v477
    %964 = vmatpush.bf16.msra.mxu0 %v474
    %965 = vmatmul.bf16.gmra.mxu0 %v928
    %v966 = vpop.f32.mrf.mxu0
    %v967 = vadd.f32 0.0, %v966
    %v968 = vpop.f32.mrf.mxu0
    %969 = vdwg.mxu0
    %v972 = vrot.slane %v954, 7
    %v973 = vsel %vm562, %v941, %v972
    %v975 = vadd.f32 %v930, %v973
    %v976 = vxor.u32 %v975, 2147483648
    %v977 = vmul.f32 %v976, 1.442695
    %v978 = vpow.pop %v977
    %v979 = vadd.f32 %v978, 1.0
    %v980 = vrcp.pop %v979
    %v981 = vmul.f32 %v979, %v980
    %v982 = vsub.f32 1.0, %v981
    %v983 = vmul.f32 %v980, %v982
    %v984 = vadd.f32 %v980, %v983
    %vm985 = vweird.f32 %v979
    %vm986 = vweird.f32 %v980
    %vm987 = vmor %vm985, %vm986
    %v988 = vsel %vm987, %v980, %v984
    %v989 = vand.u32 2147483647, %v979
    %vm990 = vcmp.eq.f32.partialorder %v989, 8.507059e+37
    %v991 = vand.u32 %v979, 2147483648
    %v992 = vor.u32 1.1754944e-38, %v991
    %v993 = vsel %vm990, %v992, %v988
    %v994 = vmul.f32 1.0, %v993
    %v995 = vadd.f32 %v967, %v388
    %v996 = vmul.f32 %v994, %v995
    %v998 = vrot.slane %v930, 2
    %v1000 = vadd.f32 %v998, %v996
    %v1001 = vtanh.pop %v1000
    %v1003 = vrot.slane %v994, 1
    %v1005 = vsub.f32 1.0, %v1003
    %v1006 = vmul.f32 %v1005, %v1001
    %v1007 = vmul.f32 %v1003, %v926
    %v1008 = vadd.f32 %v1006, %v1007
    %1009 = vst [vmem:[#allocation12 + $0x5] sm:$0x1] %v1008
    %v1010 = vpack.c.bf16 %v1008, %v1008
    %s1011 = scalar_lea.vmem [#allocation3], 6
    %v1012 = vld [vmem:[%s1011] ss:$8 sm:$0x7]
    %1013 = vmatpush.bf16.msra.mxu0 %v493
    %1014 = vmatpush.bf16.msra.mxu0 %v490
    %1015 = vmatpush.bf16.msra.mxu0 %v487
    %1016 = vmatpush.bf16.msra.mxu0 %v484
    %1017 = vmatpush.bf16.msra.mxu0 %v481
    %1018 = vmatpush.bf16.msra.mxu0 %v478
    %1019 = vmatpush.bf16.msra.mxu0 %v475
    %1020 = vmatpush.bf16.msra.mxu0 %v472
    %1021 = vmatmul.bf16.gmra.mxu0 %v1010
    %v1022 = vpop.f32.mrf.mxu0
    %v1023 = vadd.f32 0.0, %v1022
    %v1024 = vpop.f32.mrf.mxu0
    %1025 = vdwg.mxu0
    %1026 = vmatpush.bf16.msra.mxu0 %v494
    %1027 = vmatpush.bf16.msra.mxu0 %v491
    %1028 = vmatpush.bf16.msra.mxu0 %v488
    %1029 = vmatpush.bf16.msra.mxu0 %v485
    %1030 = vmatpush.bf16.msra.mxu0 %v482
    %1031 = vmatpush.bf16.msra.mxu0 %v479
    %1032 = vmatpush.bf16.msra.mxu0 %v476
    %1033 = vmatpush.bf16.msra.mxu0 %v473
    %1034 = vmatmul.bf16.gmra.mxu0 %v1010
    %v1035 = vpop.f32.mrf.mxu0
    %v1036 = vadd.f32 0.0, %v1035
    %v1037 = vpop.f32.mrf.mxu0
    %1038 = vdwg.mxu0
    %1039 = vmatpush.bf16.msra.mxu0 %v495
    %1040 = vmatpush.bf16.msra.mxu0 %v492
    %1041 = vmatpush.bf16.msra.mxu0 %v489
    %1042 = vmatpush.bf16.msra.mxu0 %v486
    %1043 = vmatpush.bf16.msra.mxu0 %v483
    %1044 = vmatpush.bf16.msra.mxu0 %v480
    %1045 = vmatpush.bf16.msra.mxu0 %v477
    %1046 = vmatpush.bf16.msra.mxu0 %v474
    %1047 = vmatmul.bf16.gmra.mxu0 %v1010
    %v1048 = vpop.f32.mrf.mxu0
    %v1049 = vadd.f32 0.0, %v1048
    %v1050 = vpop.f32.mrf.mxu0
    %1051 = vdwg.mxu0
    %v1054 = vrot.slane %v1036, 7
    %v1055 = vsel %vm562, %v1023, %v1054
    %v1057 = vadd.f32 %v1012, %v1055
    %v1058 = vxor.u32 %v1057, 2147483648
    %v1059 = vmul.f32 %v1058, 1.442695
    %v1060 = vpow.pop %v1059
    %v1061 = vadd.f32 %v1060, 1.0
    %v1062 = vrcp.pop %v1061
    %v1063 = vmul.f32 %v1061, %v1062
    %v1064 = vsub.f32 1.0, %v1063
    %v1065 = vmul.f32 %v1062, %v1064
    %v1066 = vadd.f32 %v1062, %v1065
    %vm1067 = vweird.f32 %v1061
    %vm1068 = vweird.f32 %v1062
    %vm1069 = vmor %vm1067, %vm1068
    %v1070 = vsel %vm1069, %v1062, %v1066
    %v1071 = vand.u32 2147483647, %v1061
    %vm1072 = vcmp.eq.f32.partialorder %v1071, 8.507059e+37
    %v1073 = vand.u32 %v1061, 2147483648
    %v1074 = vor.u32 1.1754944e-38, %v1073
    %v1075 = vsel %vm1072, %v1074, %v1070
    %v1076 = vmul.f32 1.0, %v1075
    %v1077 = vadd.f32 %v1049, %v388
    %v1078 = vmul.f32 %v1076, %v1077
    %v1080 = vrot.slane %v1012, 2
    %v1082 = vadd.f32 %v1080, %v1078
    %v1083 = vtanh.pop %v1082
    %v1085 = vrot.slane %v1076, 1
    %v1087 = vsub.f32 1.0, %v1085
    %v1088 = vmul.f32 %v1087, %v1083
    %v1089 = vmul.f32 %v1085, %v1008
    %v1090 = vadd.f32 %v1088, %v1089
    %1091 = vst [vmem:[#allocation12 + $0x6] sm:$0x1] %v1090
    %v1092 = vpack.c.bf16 %v1090, %v1090
    %s1093 = scalar_lea.vmem [#allocation3], 7
    %v1094 = vld [vmem:[%s1093] ss:$8 sm:$0x7]
    %1095 = vmatpush.bf16.msra.mxu0 %v493
    %1096 = vmatpush.bf16.msra.mxu0 %v490
    %1097 = vmatpush.bf16.msra.mxu0 %v487
    %1098 = vmatpush.bf16.msra.mxu0 %v484
    %1099 = vmatpush.bf16.msra.mxu0 %v481
    %1100 = vmatpush.bf16.msra.mxu0 %v478
    %1101 = vmatpush.bf16.msra.mxu0 %v475
    %1102 = vmatpush.bf16.msra.mxu0 %v472
    %1103 = vmatmul.bf16.gmra.mxu0 %v1092
    %v1104 = vpop.f32.mrf.mxu0
    %v1105 = vadd.f32 0.0, %v1104
    %v1106 = vpop.f32.mrf.mxu0
    %1107 = vdwg.mxu0
    %1108 = vmatpush.bf16.msra.mxu0 %v494
    %1109 = vmatpush.bf16.msra.mxu0 %v491
    %1110 = vmatpush.bf16.msra.mxu0 %v488
    %1111 = vmatpush.bf16.msra.mxu0 %v485
    %1112 = vmatpush.bf16.msra.mxu0 %v482
    %1113 = vmatpush.bf16.msra.mxu0 %v479
    %1114 = vmatpush.bf16.msra.mxu0 %v476
    %1115 = vmatpush.bf16.msra.mxu0 %v473
    %1116 = vmatmul.bf16.gmra.mxu0 %v1092
    %v1117 = vpop.f32.mrf.mxu0
    %v1118 = vadd.f32 0.0, %v1117
    %v1119 = vpop.f32.mrf.mxu0
    %1120 = vdwg.mxu0
    %1121 = vmatpush.bf16.msra.mxu0 %v495
    %1122 = vmatpush.bf16.msra.mxu0 %v492
    %1123 = vmatpush.bf16.msra.mxu0 %v489
    %1124 = vmatpush.bf16.msra.mxu0 %v486
    %1125 = vmatpush.bf16.msra.mxu0 %v483
    %1126 = vmatpush.bf16.msra.mxu0 %v480
    %1127 = vmatpush.bf16.msra.mxu0 %v477
    %1128 = vmatpush.bf16.msra.mxu0 %v474
    %1129 = vmatmul.bf16.gmra.mxu0 %v1092
    %v1130 = vpop.f32.mrf.mxu0
    %v1131 = vadd.f32 0.0, %v1130
    %v1132 = vpop.f32.mrf.mxu0
    %1133 = vdwg.mxu0
    %v1136 = vrot.slane %v1118, 7
    %v1137 = vsel %vm562, %v1105, %v1136
    %v1139 = vadd.f32 %v1094, %v1137
    %v1140 = vxor.u32 %v1139, 2147483648
    %v1141 = vmul.f32 %v1140, 1.442695
    %v1142 = vpow.pop %v1141
    %v1143 = vadd.f32 %v1142, 1.0
    %v1144 = vrcp.pop %v1143
    %v1145 = vmul.f32 %v1143, %v1144
    %v1146 = vsub.f32 1.0, %v1145
    %v1147 = vmul.f32 %v1144, %v1146
    %v1148 = vadd.f32 %v1144, %v1147
    %vm1149 = vweird.f32 %v1143
    %vm1150 = vweird.f32 %v1144
    %vm1151 = vmor %vm1149, %vm1150
    %v1152 = vsel %vm1151, %v1144, %v1148
    %v1153 = vand.u32 2147483647, %v1143
    %vm1154 = vcmp.eq.f32.partialorder %v1153, 8.507059e+37
    %v1155 = vand.u32 %v1143, 2147483648
    %v1156 = vor.u32 1.1754944e-38, %v1155
    %v1157 = vsel %vm1154, %v1156, %v1152
    %v1158 = vmul.f32 1.0, %v1157
    %v1159 = vadd.f32 %v1131, %v388
    %v1160 = vmul.f32 %v1158, %v1159
    %v1162 = vrot.slane %v1094, 2
    %v1164 = vadd.f32 %v1162, %v1160
    %v1165 = vtanh.pop %v1164
    %v1167 = vrot.slane %v1158, 1
    %v1169 = vsub.f32 1.0, %v1167
    %v1170 = vmul.f32 %v1169, %v1165
    %v1171 = vmul.f32 %v1167, %v1090
    %v1172 = vadd.f32 %v1170, %v1171
    %1173 = vst [vmem:[#allocation12 + $0x7] sm:$0x1] %v1172
    // Predicated region
    $region38: #{tpu_custom_call.1} parent=1 // pred_check
      _
    $region39: #{tpu_custom_call.1} parent=1 // pred_check_branch
      %1175 = sbr.rel (0) target = $region41
    $region40: #{tpu_custom_call.1} parent=1 // pred_region
      %1177 = vsyncadd [#allocation8], 0
      %s1179 = sshll.u32 [#allocation12], 4
      %s1180 = int_to_ptr.vmem [resolvable:$true] %s1179
      %s1181 = sshll.u32 %s7, 4
      %s1182 = int_to_ptr.hbm [resolvable:$true] %s1181
      %1184 = dma.vmem_to_hbm [thread:$0]  %s1180, 128, %s1182, [#allocation8]
    $region41: #{tpu_custom_call.1} parent=1 // pred_fallthru
      _
    // Predicated region
    $region42: #{tpu_custom_call.1} parent=1 // pred_check
      _
    $region43: #{tpu_custom_call.1} parent=1 // pred_check_branch
      %1186 = sbr.rel (0) target = $region45
    $region44: #{tpu_custom_call.1} parent=1 // pred_region
      %1188 = dma.done [#allocation8], 128
    $region45: #{tpu_custom_call.1} parent=1 // pred_fallthru
      _
    %1189 = vsyncpa [#allocation7], 1
    %1190 = vsyncpa [#allocation10], 1
    %1191 = vsyncpa [#allocation8], 1

</llo_original>
